<compile_context>
chip_gen: v6e
topology: v6e:2x2x1
jax: 0.10.0
libtpu: 0.0.40
codegen_flags: <defaults>
</compile_context>

<pallas_src>
import functools

import jax
import jax.numpy as jnp
from jax.experimental import pallas as pl
from jax.experimental.pallas import tpu as pltpu


NOUT = 28            # number of classes
NOUT_PAD = 128       # lane-padded head output width
K_IM2COL = 7 * 7 * 4 # 196
K_PAD = 256          # zero-padded contraction depth
C_MID = 64           # conv1 output channels
C_FEAT = 1024        # "features_4" output channels


# ------------------------------ Pallas kernel ------------------------------ #

def _fused_kernel(patches_ref, w1_ref, b1_ref, w2_ref, b2_ref,
                  wh_ref, bh_ref, out_ref, sum_ref, max_ref,
                  *, s_valid, tile_m):
    m = pl.program_id(1)
    n_m = pl.num_programs(1)

    @pl.when(m == 0)
    def _():
        sum_ref[...] = jnp.zeros_like(sum_ref)
        # y2 is post-ReLU (>= 0), so a zero init is exact for the running max.
        max_ref[...] = jnp.zeros_like(max_ref)

    # conv1 as GEMM: (tile_m, 256) bf16 @ (256, 64) bf16 -> f32, + bias
    p = patches_ref[0]
    y1 = jnp.dot(p, w1_ref[...], preferred_element_type=jnp.float32) + b1_ref[...]

    # TODO(synk): stand-in for bnInception.features_4: ReLU -> 1x1 conv -> ReLU
    y1 = jnp.maximum(y1, 0.0).astype(jnp.bfloat16)
    y2 = jnp.dot(y1, w2_ref[...], preferred_element_type=jnp.float32) + b2_ref[...]
    y2 = jnp.maximum(y2, 0.0)                                 # (tile_m, 1024) f32

    # Per-step pooling partials: reduce (tile_m, 1024) -> (8, 1024) with pure
    # vreg adds/maxes (no cross-sublane XLU work); sublanes collapse once in
    # the epilogue.  Rows beyond S only exist in the LAST tile, so masking is
    # confined there (zero mask is valid for both sum and max since y2 >= 0).
    @pl.when(m < n_m - 1)
    def _():
        yb = y2.reshape(tile_m // 8, 8, C_FEAT)
        sum_ref[...] += jnp.sum(yb, axis=0)
        max_ref[...] = jnp.maximum(max_ref[...], jnp.max(yb, axis=0))

    @pl.when(m == n_m - 1)
    def _():
        row = m * tile_m + jax.lax.broadcasted_iota(jnp.int32, (tile_m, 1), 0)
        ym = jnp.where(row < s_valid, y2, 0.0)
        yb = ym.reshape(tile_m // 8, 8, C_FEAT)
        psum = sum_ref[...] + jnp.sum(yb, axis=0)             # (8, 1024)
        pmax = jnp.maximum(max_ref[...], jnp.max(yb, axis=0)) # (8, 1024)

        # One cross-sublane collapse, then global avg + max pool and the
        # BN-folded Linear head (bf16 operands, f32 accumulation).
        tot_sum = jnp.sum(psum, axis=0, keepdims=True)        # (1, 1024)
        tot_max = jnp.max(pmax, axis=0, keepdims=True)        # (1, 1024)
        f = tot_sum * (1.0 / s_valid) + tot_max
        f8 = jnp.broadcast_to(f.astype(jnp.bfloat16), (8, C_FEAT))
        logit = jnp.dot(f8, wh_ref[...],
                        preferred_element_type=jnp.float32) + bh_ref[...]
        out_ref[...] = logit[None].astype(out_ref.dtype)      # (1, 8, 128)


def fused_forward(patches, w1, b1, w2, b2, wh, bh, *, s_valid, tile_m):
    """patches: (B, S_pad, 256) bf16; returns logits (B, 28) f32."""
    B, s_padded, kp = patches.shape
    n_m = s_padded // tile_m
    kernel = functools.partial(_fused_kernel, s_valid=s_valid, tile_m=tile_m)
    out = pl.pallas_call(
        kernel,
        out_shape=jax.ShapeDtypeStruct((B, 8, NOUT_PAD), jnp.float32),
        grid=(B, n_m),
        in_specs=[
            pl.BlockSpec((1, tile_m, kp), lambda b, m: (b, m, 0)),   # patches
            pl.BlockSpec((kp, C_MID), lambda b, m: (0, 0)),          # conv1 w (bf16)
            pl.BlockSpec((1, C_MID), lambda b, m: (0, 0)),           # conv1 b
            pl.BlockSpec((C_MID, C_FEAT), lambda b, m: (0, 0)),      # feat w (bf16)
            pl.BlockSpec((1, C_FEAT), lambda b, m: (0, 0)),          # feat b
            pl.BlockSpec((C_FEAT, NOUT_PAD), lambda b, m: (0, 0)),   # head w (bf16)
            pl.BlockSpec((1, NOUT_PAD), lambda b, m: (0, 0)),        # head b
        ],
        out_specs=pl.BlockSpec((1, 8, NOUT_PAD), lambda b, m: (b, 0, 0)),
        scratch_shapes=[pltpu.VMEM((8, C_FEAT), jnp.float32),   # running sum
                        pltpu.VMEM((8, C_FEAT), jnp.float32)],  # running max
        compiler_params=pltpu.CompilerParams(
            dimension_semantics=("parallel", "arbitrary"),
            # 48 MiB: above the v5e/v6e scoped defaults (16/32 MiB) so the
            # intended tile_m compiles as written, and still leaves headroom
            # on v7x's 64 MiB physical VMEM.
            vmem_limit_bytes=48 * 1024 * 1024,
        ),
    )(patches, w1, b1, w2, b2, wh, bh)
    return out[:, 0, :NOUT]


# ------------------------------- glue (JAX) -------------------------------- #

def init_params(key):
    ks = jax.random.split(key, 10)
    return {
        # conv1: Conv2d(4, 64, 7, stride=2, padding=3)  (PyTorch OIHW layout)
        "conv1_w": jax.random.normal(ks[0], (64, 4, 7, 7), jnp.float32) * 0.05,
        "conv1_b": jax.random.normal(ks[1], (64,), jnp.float32) * 0.05,
        # TODO(synk): stand-in for bnInception.features_4 (1x1 conv 64 -> 1024)
        "feat_w": jax.random.normal(ks[2], (1024, 64), jnp.float32) * 0.05,
        "feat_b": jax.random.normal(ks[3], (1024,), jnp.float32) * 0.05,
        # logit = Sequential(BatchNorm1d(1024), Linear(1024, 28)), BN eval mode
        "bn_gamma": 1.0 + 0.1 * jax.random.normal(ks[4], (1024,), jnp.float32),
        "bn_beta": 0.1 * jax.random.normal(ks[5], (1024,), jnp.float32),
        "bn_rm": 0.1 * jax.random.normal(ks[6], (1024,), jnp.float32),
        "bn_rv": 1.0 + 0.1 * jnp.abs(jax.random.normal(ks[7], (1024,), jnp.float32)),
        "lin_w": jax.random.normal(ks[8], (28, 1024), jnp.float32) * 0.03,
        "lin_b": jax.random.normal(ks[9], (28,), jnp.float32) * 0.03,
    }


def model_forward(x_nchw, params, *, tile_m_max=1024):
    # tile_m_max ~1024 amortizes per-step overhead and keeps VMEM use safe on
    # v7x (64 MiB); on v5e/v6e larger tiles only help marginally (MXU cycles
    # per row are tile-size independent) and need vmem_limit_bytes raised.
    B, C, H, W = x_nchw.shape
    assert C == 4
    x = x_nchw.astype(jnp.float32)

    # mean = [128, 117, 104] on original channels 0/1/2 (the second assignment
    # in the PyTorch forward wins).  Subtracted before zero padding, so it
    # cannot be folded into the conv bias exactly; the [2,1,0,3] channel
    # permute IS folded into the conv1 weight below.
    mean = jnp.array([128.0, 117.0, 104.0, 0.0], jnp.float32)
    x = jnp.transpose(x, (0, 2, 3, 1)) - mean               # NHWC, mean-subtracted
    # Cast to bf16 BEFORE the 49x im2col expansion: every wrapper pass over the
    # expanded tensor is half-width from here on.
    x = x.astype(jnp.bfloat16)

    kh = kw = 7
    stride, pad = 2, 3
    Ho = (H + 2 * pad - kh) // stride + 1
    Wo = (W + 2 * pad - kw) // stride + 1
    S = Ho * Wo

    # M tiling: pad S up to a multiple of tile_m; padded rows (only in the last
    # tile) are masked in-kernel so the pools stay exact.
    tile_m = tile_m_max if S >= tile_m_max else max(8, -(-S // 8) * 8)
    n_m = -(-S // tile_m)
    s_padded = n_m * tile_m

    # TODO(synk): build the im2col slab inside the Pallas kernel from a row
    # band of the raw NHWC input (memory_space=pl.ANY + manual DMA) to remove
    # this HBM-materialized patch tensor entirely.
    #
    # bf16 im2col with the S- and K-zero-padding fused into the same pass:
    # taps are written straight into a pre-zeroed (B, S_pad, 256) buffer, so
    # there is no pad-after-stack full-size copy.
    xp = jnp.pad(x, ((0, 0), (pad, pad), (pad, pad), (0, 0)))
    patches = jnp.zeros((B, s_padded, K_PAD), jnp.bfloat16)
    for i in range(kh):
        for j in range(kw):
            tap = xp[:, i:i + stride * Ho:stride,
                     j:j + stride * Wo:stride, :].reshape(B, S, C)
            k0 = (i * kw + j) * C
            patches = patches.at[:, :S, k0:k0 + C].set(tap)

    # conv1 weight: fold the [2,1,0,3] permute into the input-channel axis,
    # reorder to (kh, kw, Cin, Cout) matching the tap-major im2col columns,
    # zero-pad K 196 -> 256, cast to bf16 for the MXU.
    perm = jnp.array([2, 1, 0, 3])
    w1 = params["conv1_w"][:, perm, :, :]                           # (64,4,7,7)
    w1 = jnp.transpose(w1, (2, 3, 1, 0)).reshape(K_IM2COL, C_MID)   # (196,64)
    w1 = jnp.pad(w1, ((0, K_PAD - K_IM2COL), (0, 0))).astype(jnp.bfloat16)
    b1 = params["conv1_b"].reshape(1, C_MID)

    # features stand-in weights (1x1 conv 64 -> 1024)
    w2 = params["feat_w"].T.astype(jnp.bfloat16)                    # (64,1024)
    b2 = params["feat_b"].reshape(1, C_FEAT)

    # head: fold eval-mode BatchNorm1d into the Linear; pad N 28 -> 128.
    # Head weight is bf16 (f32 accumulation in-kernel); bias stays f32.
    eps = 1e-5
    scale = params["bn_gamma"] / jnp.sqrt(params["bn_rv"] + eps)    # (1024,)
    shift = params["bn_beta"] - params["bn_rm"] * scale             # (1024,)
    wl = params["lin_w"].T                                          # (1024,28)
    wh = jnp.pad(scale[:, None] * wl, ((0, 0), (0, NOUT_PAD - NOUT)))
    bh = jnp.pad(shift @ wl + params["lin_b"],
                 (0, NOUT_PAD - NOUT)).reshape(1, NOUT_PAD)

    return fused_forward(patches, w1, b1, w2, b2,
                         wh.astype(jnp.bfloat16), bh.astype(jnp.float32),
                         s_valid=S, tile_m=tile_m)                  # (B, 28)


if __name__ == "__main__":
    key = jax.random.PRNGKey(0)
    k_x, k_p = jax.random.split(key)
    # small shapes consistent with the module: batch=2, 4 channels, 16x16 image
    x = jax.random.uniform(k_x, (2, 4, 16, 16), jnp.float32) * 255.0
    params = init_params(k_p)

    logit = jax.jit(model_forward)(x, params)
    logit = jax.block_until_ready(logit)
    assert logit.shape == (2, 28) and logit.dtype == jnp.float32
    assert bool(jnp.all(jnp.isfinite(logit)))
    print("KERNEL_OK")
</pallas_src>

<mosaic_0001>
module attributes {stable_mosaic.version = 11 : i64} {
  func.func @_fused_kernel(%arg0: i32, %arg1: i32, %arg2: memref<1x64x256xbf16, #tpu.memory_space<vmem>>, %arg3: memref<256x64xbf16, #tpu.memory_space<vmem>>, %arg4: memref<1x64xf32, #tpu.memory_space<vmem>>, %arg5: memref<64x1024xbf16, #tpu.memory_space<vmem>>, %arg6: memref<1x1024xf32, #tpu.memory_space<vmem>>, %arg7: memref<1024x128xbf16, #tpu.memory_space<vmem>>, %arg8: memref<1x128xf32, #tpu.memory_space<vmem>>, %arg9: memref<1x8x128xf32, #tpu.memory_space<vmem>>, %arg10: memref<8x1024xf32, #tpu.memory_space<vmem>>, %arg11: memref<8x1024xf32, #tpu.memory_space<vmem>>) attributes {dimension_semantics = [#tpu.dimension_semantics<parallel>, #tpu.dimension_semantics<arbitrary>], iteration_bounds = array<i64: 2, 1>, scalar_prefetch = 0 : i64, scratch_operands = 2 : i64, tpu.core_type = #tpu.core_type<tc>, window_params = [{transform_indices = @transform_0, window_bounds = array<i64: 1, 64, 256>}, {pipeline_mode = #tpu.pipeline_mode<synchronous>, transform_indices = @transform_1, window_bounds = array<i64: 256, 64>}, {pipeline_mode = #tpu.pipeline_mode<synchronous>, transform_indices = @transform_2, window_bounds = array<i64: 1, 64>}, {pipeline_mode = #tpu.pipeline_mode<synchronous>, transform_indices = @transform_3, window_bounds = array<i64: 64, 1024>}, {pipeline_mode = #tpu.pipeline_mode<synchronous>, transform_indices = @transform_4, window_bounds = array<i64: 1, 1024>}, {pipeline_mode = #tpu.pipeline_mode<synchronous>, transform_indices = @transform_5, window_bounds = array<i64: 1024, 128>}, {pipeline_mode = #tpu.pipeline_mode<synchronous>, transform_indices = @transform_6, window_bounds = array<i64: 1, 128>}, {transform_indices = @transform_7, window_bounds = array<i64: 1, 8, 128>}]} {
    %c0_i32 = arith.constant 0 : i32
    %0 = arith.cmpi eq, %arg1, %c0_i32 : i32
    %1 = arith.extui %0 : i1 to i32
    %c0_i32_0 = arith.constant 0 : i32
    %2 = arith.cmpi ne, %1, %c0_i32_0 : i32
    scf.if %2 {
      %cst_18 = arith.constant 0.000000e+00 : f32
      %26 = vector.broadcast %cst_18 : f32 to vector<8x1024xf32>
      %c0_19 = arith.constant 0 : index
      %c0_20 = arith.constant 0 : index
      %27 = vector.load %arg10[%c0_19, %c0_20] : memref<8x1024xf32, #tpu.memory_space<vmem>>, vector<8x1024xf32>
      tpu.vector_store %arg10[%c0_19, %c0_20], %26 {strides = array<i32>} : memref<8x1024xf32, #tpu.memory_space<vmem>>, vector<8x1024xf32>,
      %cst_21 = arith.constant 0.000000e+00 : f32
      %28 = vector.broadcast %cst_21 : f32 to vector<8x1024xf32>
      %c0_22 = arith.constant 0 : index
      %c0_23 = arith.constant 0 : index
      %29 = vector.load %arg11[%c0_22, %c0_23] : memref<8x1024xf32, #tpu.memory_space<vmem>>, vector<8x1024xf32>
      tpu.vector_store %arg11[%c0_22, %c0_23], %28 {strides = array<i32>} : memref<8x1024xf32, #tpu.memory_space<vmem>>, vector<8x1024xf32>,
    } else {
    }
    %c0 = arith.constant 0 : index
    %c0_1 = arith.constant 0 : index
    %c0_2 = arith.constant 0 : index
    %3 = vector.load %arg2[%c0, %c0_1, %c0_2] : memref<1x64x256xbf16, #tpu.memory_space<vmem>>, vector<1x64x256xbf16>
    %4 = vector.shape_cast %3 : vector<1x64x256xbf16> to vector<64x256xbf16>
    %c0_3 = arith.constant 0 : index
    %c0_4 = arith.constant 0 : index
    %5 = vector.load %arg3[%c0_3, %c0_4] : memref<256x64xbf16, #tpu.memory_space<vmem>>, vector<256x64xbf16>
    %cst = arith.constant dense<0.000000e+00> : vector<64x64xf32>
    %6 = tpu.matmul %4, %5, %cst {dimension_numbers = #tpu.dot_dimension_numbers<[1], [0], [0], [1], [0, 0, 1, 1], [], []>} : vector<64x256xbf16>, vector<256x64xbf16>, vector<64x64xf32> -> vector<64x64xf32>
    %c0_5 = arith.constant 0 : index
    %c0_6 = arith.constant 0 : index
    %7 = vector.load %arg4[%c0_5, %c0_6] : memref<1x64xf32, #tpu.memory_space<vmem>>, vector<1x64xf32>
    %8 = vector.broadcast %7 : vector<1x64xf32> to vector<64x64xf32>
    %9 = arith.addf %6, %8 : vector<64x64xf32>
    %cst_7 = arith.constant 0.000000e+00 : f32
    %10 = vector.broadcast %cst_7 : f32 to vector<64x64xf32>
    %11 = arith.maximumf %9, %10 : vector<64x64xf32>
    %12 = arith.truncf %11 : vector<64x64xf32> to vector<64x64xbf16>
    %c0_8 = arith.constant 0 : index
    %c0_9 = arith.constant 0 : index
    %13 = vector.load %arg5[%c0_8, %c0_9] : memref<64x1024xbf16, #tpu.memory_space<vmem>>, vector<64x1024xbf16>
    %cst_10 = arith.constant dense<0.000000e+00> : vector<64x1024xf32>
    %14 = tpu.matmul %12, %13, %cst_10 {dimension_numbers = #tpu.dot_dimension_numbers<[1], [0], [0], [1], [0, 0, 1, 1], [], []>} : vector<64x64xbf16>, vector<64x1024xbf16>, vector<64x1024xf32> -> vector<64x1024xf32>
    %c0_11 = arith.constant 0 : index
    %c0_12 = arith.constant 0 : index
    %15 = vector.load %arg6[%c0_11, %c0_12] : memref<1x1024xf32, #tpu.memory_space<vmem>>, vector<1x1024xf32>
    %16 = vector.broadcast %15 : vector<1x1024xf32> to vector<64x1024xf32>
    %17 = arith.addf %14, %16 : vector<64x1024xf32>
    %cst_13 = arith.constant 0.000000e+00 : f32
    %18 = vector.broadcast %cst_13 : f32 to vector<64x1024xf32>
    %19 = arith.maximumf %17, %18 : vector<64x1024xf32>
    %c0_i32_14 = arith.constant 0 : i32
    %20 = arith.cmpi slt, %arg1, %c0_i32_14 : i32
    %21 = arith.extui %20 : i1 to i32
    %c0_i32_15 = arith.constant 0 : i32
    %22 = arith.cmpi ne, %21, %c0_i32_15 : i32
    scf.if %22 {
      %26 = vector.shape_cast %19 : vector<64x1024xf32> to vector<8x8x1024xf32>
      %c0_18 = arith.constant 0 : index
      %c0_19 = arith.constant 0 : index
      %27 = vector.load %arg10[%c0_18, %c0_19] : memref<8x1024xf32, #tpu.memory_space<vmem>>, vector<8x1024xf32>
      %cst_20 = arith.constant dense<0.000000e+00> : vector<8x1024xf32>
      %28 = vector.multi_reduction <add>, %26, %cst_20 [0] : vector<8x8x1024xf32> to vector<8x1024xf32>
      %29 = arith.addf %27, %28 : vector<8x1024xf32>
      %c0_21 = arith.constant 0 : index
      %c0_22 = arith.constant 0 : index
      %30 = vector.load %arg10[%c0_21, %c0_22] : memref<8x1024xf32, #tpu.memory_space<vmem>>, vector<8x1024xf32>
      tpu.vector_store %arg10[%c0_21, %c0_22], %29 {strides = array<i32>} : memref<8x1024xf32, #tpu.memory_space<vmem>>, vector<8x1024xf32>,
      %c0_23 = arith.constant 0 : index
      %c0_24 = arith.constant 0 : index
      %31 = vector.load %arg11[%c0_23, %c0_24] : memref<8x1024xf32, #tpu.memory_space<vmem>>, vector<8x1024xf32>
      %cst_25 = arith.constant dense<0xFF800000> : vector<8x1024xf32>
      %32 = vector.multi_reduction <maximumf>, %26, %cst_25 [0] : vector<8x8x1024xf32> to vector<8x1024xf32>
      %33 = arith.maximumf %31, %32 : vector<8x1024xf32>
      %c0_26 = arith.constant 0 : index
      %c0_27 = arith.constant 0 : index
      %34 = vector.load %arg11[%c0_26, %c0_27] : memref<8x1024xf32, #tpu.memory_space<vmem>>, vector<8x1024xf32>
      tpu.vector_store %arg11[%c0_26, %c0_27], %33 {strides = array<i32>} : memref<8x1024xf32, #tpu.memory_space<vmem>>, vector<8x1024xf32>,
    } else {
    }
    %c0_i32_16 = arith.constant 0 : i32
    %23 = arith.cmpi eq, %arg1, %c0_i32_16 : i32
    %24 = arith.extui %23 : i1 to i32
    %c0_i32_17 = arith.constant 0 : i32
    %25 = arith.cmpi ne, %24, %c0_i32_17 : i32
    scf.if %25 {
      %c64_i32 = arith.constant 64 : i32
      %26 = arith.muli %arg1, %c64_i32 : i32
      %27 = tpu.iota {dimensions = array<i32: 0>} : vector<64x1xi32>
      %28 = vector.broadcast %26 : i32 to vector<64x1xi32>
      %29 = arith.addi %28, %27 : vector<64x1xi32>
      %c64_i32_18 = arith.constant 64 : i32
      %30 = vector.broadcast %c64_i32_18 : i32 to vector<64x1xi32>
      %31 = arith.cmpi slt, %29, %30 : vector<64x1xi32>
      %cst_19 = arith.constant 0.000000e+00 : f32
      %32 = vector.shape_cast %31 : vector<64x1xi1> to vector<64x1xi1>
      %33 = vector.broadcast %32 : vector<64x1xi1> to vector<64x1024xi1>
      %34 = vector.broadcast %cst_19 : f32 to vector<64x1024xf32>
      %35 = arith.select %33, %19, %34 : vector<64x1024xi1>, vector<64x1024xf32>
      %36 = vector.shape_cast %35 : vector<64x1024xf32> to vector<8x8x1024xf32>
      %c0_20 = arith.constant 0 : index
      %c0_21 = arith.constant 0 : index
      %37 = vector.load %arg10[%c0_20, %c0_21] : memref<8x1024xf32, #tpu.memory_space<vmem>>, vector<8x1024xf32>
      %cst_22 = arith.constant dense<0.000000e+00> : vector<8x1024xf32>
      %38 = vector.multi_reduction <add>, %36, %cst_22 [0] : vector<8x8x1024xf32> to vector<8x1024xf32>
      %39 = arith.addf %37, %38 : vector<8x1024xf32>
      %c0_23 = arith.constant 0 : index
      %c0_24 = arith.constant 0 : index
      %40 = vector.load %arg11[%c0_23, %c0_24] : memref<8x1024xf32, #tpu.memory_space<vmem>>, vector<8x1024xf32>
      %cst_25 = arith.constant dense<0xFF800000> : vector<8x1024xf32>
      %41 = vector.multi_reduction <maximumf>, %36, %cst_25 [0] : vector<8x8x1024xf32> to vector<8x1024xf32>
      %42 = arith.maximumf %40, %41 : vector<8x1024xf32>
      %cst_26 = arith.constant dense<0.000000e+00> : vector<1024xf32>
      %43 = vector.multi_reduction <add>, %39, %cst_26 [0] : vector<8x1024xf32> to vector<1024xf32>
      %44 = vector.shape_cast %43 : vector<1024xf32> to vector<1x1024xf32>
      %cst_27 = arith.constant dense<0xFF800000> : vector<1024xf32>
      %45 = vector.multi_reduction <maximumf>, %42, %cst_27 [0] : vector<8x1024xf32> to vector<1024xf32>
      %46 = vector.shape_cast %45 : vector<1024xf32> to vector<1x1024xf32>
      %cst_28 = arith.constant 1.562500e-02 : f32
      %47 = vector.broadcast %cst_28 : f32 to vector<1x1024xf32>
      %48 = arith.mulf %44, %47 : vector<1x1024xf32>
      %49 = arith.addf %48, %46 : vector<1x1024xf32>
      %50 = arith.truncf %49 : vector<1x1024xf32> to vector<1x1024xbf16>
      %51 = vector.shape_cast %50 : vector<1x1024xbf16> to vector<1x1024xbf16>
      %52 = vector.broadcast %51 : vector<1x1024xbf16> to vector<8x1024xbf16>
      %c0_29 = arith.constant 0 : index
      %c0_30 = arith.constant 0 : index
      %53 = vector.load %arg7[%c0_29, %c0_30] : memref<1024x128xbf16, #tpu.memory_space<vmem>>, vector<1024x128xbf16>
      %cst_31 = arith.constant dense<0.000000e+00> : vector<8x128xf32>
      %54 = tpu.matmul %52, %53, %cst_31 {dimension_numbers = #tpu.dot_dimension_numbers<[1], [0], [0], [1], [0, 0, 1, 1], [], []>} : vector<8x1024xbf16>, vector<1024x128xbf16>, vector<8x128xf32> -> vector<8x128xf32>
      %c0_32 = arith.constant 0 : index
      %c0_33 = arith.constant 0 : index
      %55 = vector.load %arg8[%c0_32, %c0_33] : memref<1x128xf32, #tpu.memory_space<vmem>>, vector<1x128xf32>
      %56 = vector.broadcast %55 : vector<1x128xf32> to vector<8x128xf32>
      %57 = arith.addf %54, %56 : vector<8x128xf32>
      %58 = vector.shape_cast %57 : vector<8x128xf32> to vector<1x8x128xf32>
      %c0_34 = arith.constant 0 : index
      %c0_35 = arith.constant 0 : index
      %c0_36 = arith.constant 0 : index
      %59 = vector.load %arg9[%c0_34, %c0_35, %c0_36] : memref<1x8x128xf32, #tpu.memory_space<vmem>>, vector<1x8x128xf32>
      tpu.vector_store %arg9[%c0_34, %c0_35, %c0_36], %58 {strides = array<i32>} : memref<1x8x128xf32, #tpu.memory_space<vmem>>, vector<1x8x128xf32>,
    } else {
    }
    return
  }
  func.func @transform_0(%arg0: i32, %arg1: i32) -> (i32, i32, i32) {
    %c0_i32 = arith.constant 0 : i32
    %c0_i32_0 = arith.constant 0 : i32
    return %arg0, %arg1, %c0_i32 : i32, i32, i32
  }
  func.func @transform_1(%arg0: i32, %arg1: i32) -> (i32, i32) {
    %c0_i32 = arith.constant 0 : i32
    %c0_i32_0 = arith.constant 0 : i32
    %c0_i32_1 = arith.constant 0 : i32
    return %c0_i32, %c0_i32_0 : i32, i32
  }
  func.func @transform_2(%arg0: i32, %arg1: i32) -> (i32, i32) {
    %c0_i32 = arith.constant 0 : i32
    %c0_i32_0 = arith.constant 0 : i32
    %c0_i32_1 = arith.constant 0 : i32
    return %c0_i32, %c0_i32_0 : i32, i32
  }
  func.func @transform_3(%arg0: i32, %arg1: i32) -> (i32, i32) {
    %c0_i32 = arith.constant 0 : i32
    %c0_i32_0 = arith.constant 0 : i32
    %c0_i32_1 = arith.constant 0 : i32
    return %c0_i32, %c0_i32_0 : i32, i32
  }
  func.func @transform_4(%arg0: i32, %arg1: i32) -> (i32, i32) {
    %c0_i32 = arith.constant 0 : i32
    %c0_i32_0 = arith.constant 0 : i32
    %c0_i32_1 = arith.constant 0 : i32
    return %c0_i32, %c0_i32_0 : i32, i32
  }
  func.func @transform_5(%arg0: i32, %arg1: i32) -> (i32, i32) {
    %c0_i32 = arith.constant 0 : i32
    %c0_i32_0 = arith.constant 0 : i32
    %c0_i32_1 = arith.constant 0 : i32
    return %c0_i32, %c0_i32_0 : i32, i32
  }
  func.func @transform_6(%arg0: i32, %arg1: i32) -> (i32, i32) {
    %c0_i32 = arith.constant 0 : i32
    %c0_i32_0 = arith.constant 0 : i32
    %c0_i32_1 = arith.constant 0 : i32
    return %c0_i32, %c0_i32_0 : i32, i32
  }
  func.func @transform_7(%arg0: i32, %arg1: i32) -> (i32, i32, i32) {
    %c0_i32 = arith.constant 0 : i32
    %c0_i32_0 = arith.constant 0 : i32
    %c0_i32_1 = arith.constant 0 : i32
    return %arg0, %c0_i32, %c0_i32_0 : i32, i32, i32
  }
}

</mosaic_0001>

<llo_original>
// kernel: model_forward.1
$region0: #{model_forward.1}
  #allocation0 [shape = 'u32[]', space=smem, size = 0x4, offset = 0x4, fixed_abs, tag = 'smem constant byte address 0x4 - core index']
  #allocation1 [shape = 'u32[144,128]{1,0:T(1,128)}', space=vmem, size = 0x12000, scoped, tag = 'internal scratch']
  #allocation2 [shape = 'f32[8,1024]{1,0:T(8,128)}', space=vmem, size = 0x8000, scoped, tag = 'scratch operand']
  #allocation3 [shape = 'f32[8,1024]{1,0:T(8,128)}', space=vmem, size = 0x8000, scoped, tag = 'scratch operand']
  %s0 = inlined_call_operand.vmem [shape: bf16[2,64,256], index: 0, kind: input, shape index: {}]
  %s1 = inlined_call_operand.vmem [shape: bf16[256,64], index: 1, kind: input, shape index: {}]
  %s2 = inlined_call_operand.vmem [shape: f32[1,64], index: 2, kind: input, shape index: {}]
  %s3 = inlined_call_operand.vmem [shape: bf16[64,1024], index: 3, kind: input, shape index: {}]
  %s4 = inlined_call_operand.vmem [shape: f32[1,1024], index: 4, kind: input, shape index: {}]
  %s5 = inlined_call_operand.vmem [shape: bf16[1024,128], index: 5, kind: input, shape index: {}]
  %s6 = inlined_call_operand.vmem [shape: f32[1,128], index: 6, kind: input, shape index: {}]
  %s7 = inlined_call_operand.vmem [shape: f32[2,8,128], index: 7, kind: output, shape index: {}]
  %s8 = sld [smem:[#allocation0]]
  $region73: #{model_forward.1} parent=0
    _
  %s10 = ssub.s32 1, %s8
  %s11 = scalar_select 0, %s10, %s8
  loop: start=0, step=1, limit=4
  $region2: #{model_forward.1} parent=0 // loop_pre_header
    _
  $region3: #{model_forward.1} parent=0 // loop_header
    %s13 = sphi 0, %s17
    %p14 = scmp.ge.s32.totalorder %s13, 4
    %s20 = sphi 0, %s32
    %s21 = sphi 0, %s28
    %s22 = sphi 0, %s20
    %s23 = sphi 0, %s21
    %s24 = sphi 0, %s22
    %s25 = sphi 0, %s23
    %s37 = sphi 0, %s39
    %s40 = sphi 0, %s37
    %s41 = sphi 0, %s40
    %s57 = sphi 0, %s41
    %s61 = sphi 0, %s61
    %s63 = sphi 0, %s61
    %s64 = sphi 0, %s63
    %s78 = sphi 0, %s64
    %s82 = sphi 0, %s82
    %s84 = sphi 0, %s82
    %s85 = sphi 0, %s84
    %s99 = sphi 0, %s85
    %s103 = sphi 0, %s103
    %s105 = sphi 0, %s103
    %s106 = sphi 0, %s105
    %s120 = sphi 0, %s106
    %s124 = sphi 0, %s124
    %s126 = sphi 0, %s124
    %s127 = sphi 0, %s126
    %s141 = sphi 0, %s127
    %s145 = sphi 0, %s145
    %s147 = sphi 0, %s145
    %s148 = sphi 0, %s147
    %s162 = sphi 0, %s148
    %s166 = sphi 0, %s166
    %s168 = sphi 0, %s166
    %s169 = sphi 0, %s168
    %s183 = sphi 0, %s169
    %s189 = sphi 0, %s191
    %s192 = sphi 0, %s189
    %s193 = sphi 0, %s192
    %s209 = sphi 0, %s193
  $region4: #{model_forward.1} parent=0 // loop_header_branch
    %16 = sbr.rel (%p14) target = $region8
  $region5: #{model_forward.1} parent=0 // loop_body
    %s18 = ssub.s32 %s13, 1
    %s19 = ssub.s32 %s13, 2
    %s26 = sadd.s32 1, %s21
    %p27 = scmp.ge.s32.totalorder %s26, 1
    %s28 = scalar_select %p27, 0, %s26
    %s29 = sadd.s32 1, %s20
    %s30 = scalar_select %p27, %s29, %s20
    %p31 = scmp.ge.s32.totalorder %s30, 2
    %s32 = scalar_select %p31, 0, %s30
    %s33 = ssub.s32 %s20, %s32
    %s34 = ssub.s32 %s21, %s28
    %s35 = sor.u32 %s33, %s34
    %p36 = scmp.eq.s32.totalorder %s35, 0
    %s38 = sadd.s32 %s37, 1
    %s39 = scalar_select %p36, %s37, %s38
    %p42 = pneg %p36
    %p43 = scmp.eq.s32.totalorder %s13, 1
    %p44 = por %p42, %p43
    %p45 = scmp.ne.s32.totalorder %s37, %s40
    %p46 = scmp.eq.s32.totalorder %s13, 0
    %p47 = por %p45, %p46
    %p48 = scmp.ne.s32.totalorder %s37, %s40
    %p49 = scmp.eq.s32.totalorder %s18, 1
    %p50 = por %p48, %p49
    %p51 = scmp.ne.s32.totalorder %s40, %s41
    %p52 = scmp.eq.s32.totalorder %s18, 0
    %p53 = por %p51, %p52
    %p54 = scmp.ne.s32.totalorder %s40, %s41
    %p55 = scmp.eq.s32.totalorder %s19, 1
    %p56 = por %p54, %p55
    %p58 = scmp.ne.s32.totalorder %s41, %s57
    %p59 = scmp.eq.s32.totalorder %s19, 0
    %p60 = por %p58, %p59
    %s62 = sadd.s32 %s61, 1
    %p65 = scmp.eq.s32.totalorder %s13, 1
    %p66 = scmp.ne.s32.totalorder %s61, %s63
    %p67 = scmp.eq.s32.totalorder %s13, 0
    %p68 = por %p66, %p67
    %p69 = scmp.ne.s32.totalorder %s61, %s63
    %p70 = scmp.eq.s32.totalorder %s18, 1
    %p71 = por %p69, %p70
    %p72 = scmp.ne.s32.totalorder %s63, %s64
    %p73 = scmp.eq.s32.totalorder %s18, 0
    %p74 = por %p72, %p73
    %p75 = scmp.ne.s32.totalorder %s63, %s64
    %p76 = scmp.eq.s32.totalorder %s19, 1
    %p77 = por %p75, %p76
    %p79 = scmp.ne.s32.totalorder %s64, %s78
    %p80 = scmp.eq.s32.totalorder %s19, 0
    %p81 = por %p79, %p80
    %s83 = sadd.s32 %s82, 1
    %p86 = scmp.eq.s32.totalorder %s13, 1
    %p87 = scmp.ne.s32.totalorder %s82, %s84
    %p88 = scmp.eq.s32.totalorder %s13, 0
    %p89 = por %p87, %p88
    %p90 = scmp.ne.s32.totalorder %s82, %s84
    %p91 = scmp.eq.s32.totalorder %s18, 1
    %p92 = por %p90, %p91
    %p93 = scmp.ne.s32.totalorder %s84, %s85
    %p94 = scmp.eq.s32.totalorder %s18, 0
    %p95 = por %p93, %p94
    %p96 = scmp.ne.s32.totalorder %s84, %s85
    %p97 = scmp.eq.s32.totalorder %s19, 1
    %p98 = por %p96, %p97
    %p100 = scmp.ne.s32.totalorder %s85, %s99
    %p101 = scmp.eq.s32.totalorder %s19, 0
    %p102 = por %p100, %p101
    %s104 = sadd.s32 %s103, 1
    %p107 = scmp.eq.s32.totalorder %s13, 1
    %p108 = scmp.ne.s32.totalorder %s103, %s105
    %p109 = scmp.eq.s32.totalorder %s13, 0
    %p110 = por %p108, %p109
    %p111 = scmp.ne.s32.totalorder %s103, %s105
    %p112 = scmp.eq.s32.totalorder %s18, 1
    %p113 = por %p111, %p112
    %p114 = scmp.ne.s32.totalorder %s105, %s106
    %p115 = scmp.eq.s32.totalorder %s18, 0
    %p116 = por %p114, %p115
    %p117 = scmp.ne.s32.totalorder %s105, %s106
    %p118 = scmp.eq.s32.totalorder %s19, 1
    %p119 = por %p117, %p118
    %p121 = scmp.ne.s32.totalorder %s106, %s120
    %p122 = scmp.eq.s32.totalorder %s19, 0
    %p123 = por %p121, %p122
    %s125 = sadd.s32 %s124, 1
    %p128 = scmp.eq.s32.totalorder %s13, 1
    %p129 = scmp.ne.s32.totalorder %s124, %s126
    %p130 = scmp.eq.s32.totalorder %s13, 0
    %p131 = por %p129, %p130
    %p132 = scmp.ne.s32.totalorder %s124, %s126
    %p133 = scmp.eq.s32.totalorder %s18, 1
    %p134 = por %p132, %p133
    %p135 = scmp.ne.s32.totalorder %s126, %s127
    %p136 = scmp.eq.s32.totalorder %s18, 0
    %p137 = por %p135, %p136
    %p138 = scmp.ne.s32.totalorder %s126, %s127
    %p139 = scmp.eq.s32.totalorder %s19, 1
    %p140 = por %p138, %p139
    %p142 = scmp.ne.s32.totalorder %s127, %s141
    %p143 = scmp.eq.s32.totalorder %s19, 0
    %p144 = por %p142, %p143
    %s146 = sadd.s32 %s145, 1
    %p149 = scmp.eq.s32.totalorder %s13, 1
    %p150 = scmp.ne.s32.totalorder %s145, %s147
    %p151 = scmp.eq.s32.totalorder %s13, 0
    %p152 = por %p150, %p151
    %p153 = scmp.ne.s32.totalorder %s145, %s147
    %p154 = scmp.eq.s32.totalorder %s18, 1
    %p155 = por %p153, %p154
    %p156 = scmp.ne.s32.totalorder %s147, %s148
    %p157 = scmp.eq.s32.totalorder %s18, 0
    %p158 = por %p156, %p157
    %p159 = scmp.ne.s32.totalorder %s147, %s148
    %p160 = scmp.eq.s32.totalorder %s19, 1
    %p161 = por %p159, %p160
    %p163 = scmp.ne.s32.totalorder %s148, %s162
    %p164 = scmp.eq.s32.totalorder %s19, 0
    %p165 = por %p163, %p164
    %s167 = sadd.s32 %s166, 1
    %p170 = scmp.eq.s32.totalorder %s13, 1
    %p171 = scmp.ne.s32.totalorder %s166, %s168
    %p172 = scmp.eq.s32.totalorder %s13, 0
    %p173 = por %p171, %p172
    %p174 = scmp.ne.s32.totalorder %s166, %s168
    %p175 = scmp.eq.s32.totalorder %s18, 1
    %p176 = por %p174, %p175
    %p177 = scmp.ne.s32.totalorder %s168, %s169
    %p178 = scmp.eq.s32.totalorder %s18, 0
    %p179 = por %p177, %p178
    %p180 = scmp.ne.s32.totalorder %s168, %s169
    %p181 = scmp.eq.s32.totalorder %s19, 1
    %p182 = por %p180, %p181
    %p184 = scmp.ne.s32.totalorder %s169, %s183
    %p185 = scmp.eq.s32.totalorder %s19, 0
    %p186 = por %p184, %p185
    %s187 = ssub.s32 %s20, %s32
    %p188 = scmp.eq.s32.totalorder %s187, 0
    %s190 = sadd.s32 %s189, 1
    %s191 = scalar_select %p188, %s189, %s190
    %p194 = pneg %p188
    %p195 = scmp.eq.s32.totalorder %s13, 1
    %p196 = por %p194, %p195
    %p197 = scmp.ne.s32.totalorder %s189, %s192
    %p198 = scmp.eq.s32.totalorder %s13, 0
    %p199 = por %p197, %p198
    %p200 = scmp.ne.s32.totalorder %s189, %s192
    %p201 = scmp.eq.s32.totalorder %s18, 1
    %p202 = por %p200, %p201
    %p203 = scmp.ne.s32.totalorder %s192, %s193
    %p204 = scmp.eq.s32.totalorder %s18, 0
    %p205 = por %p203, %p204
    %p206 = scmp.ne.s32.totalorder %s192, %s193
    %p207 = scmp.eq.s32.totalorder %s19, 1
    %p208 = por %p206, %p207
    %p210 = scmp.ne.s32.totalorder %s193, %s209
    %p211 = scmp.eq.s32.totalorder %s19, 0
    %p212 = por %p210, %p211
    %p213 = scmp.le.s32.totalorder 1, %s13
    %p214 = scmp.lt.s32.totalorder %s13, 3
    %p215 = pnand %p213, %p214
    %p216 = pneg %p215
    // Predicated region
    $region9: #{model_forward.1} parent=5 // pred_check
      _
    $region10: #{model_forward.1} parent=5 // pred_check_branch
      %218 = sbr.rel (%p215) target = $region12
    $region11: #{model_forward.1} parent=5 // pred_region
      %s219 = ssub.s32 %s13, 1
      // Predicated region
      $region13: #{model_forward.1} parent=11 // pred_check
        %p220 = pneg %p74
      $region14: #{model_forward.1} parent=11 // pred_check_branch
        %222 = sbr.rel (%p220) target = $region16
      $region15: #{model_forward.1} parent=11 // pred_region
        _
      $region16: #{model_forward.1} parent=11 // pred_fallthru
        _
      // Predicated region
      $region17: #{model_forward.1} parent=11 // pred_check
        %p223 = pneg %p95
      $region18: #{model_forward.1} parent=11 // pred_check_branch
        %225 = sbr.rel (%p223) target = $region20
      $region19: #{model_forward.1} parent=11 // pred_region
        _
      $region20: #{model_forward.1} parent=11 // pred_fallthru
        _
      // Predicated region
      $region21: #{model_forward.1} parent=11 // pred_check
        %p226 = pneg %p116
      $region22: #{model_forward.1} parent=11 // pred_check_branch
        %228 = sbr.rel (%p226) target = $region24
      $region23: #{model_forward.1} parent=11 // pred_region
        _
      $region24: #{model_forward.1} parent=11 // pred_fallthru
        _
      // Predicated region
      $region25: #{model_forward.1} parent=11 // pred_check
        %p229 = pneg %p137
      $region26: #{model_forward.1} parent=11 // pred_check_branch
        %231 = sbr.rel (%p229) target = $region28
      $region27: #{model_forward.1} parent=11 // pred_region
        _
      $region28: #{model_forward.1} parent=11 // pred_fallthru
        _
      // Predicated region
      $region29: #{model_forward.1} parent=11 // pred_check
        %p232 = pneg %p158
      $region30: #{model_forward.1} parent=11 // pred_check_branch
        %234 = sbr.rel (%p232) target = $region32
      $region31: #{model_forward.1} parent=11 // pred_region
        _
      $region32: #{model_forward.1} parent=11 // pred_fallthru
        _
      // Predicated region
      $region33: #{model_forward.1} parent=11 // pred_check
        %p235 = pneg %p179
      $region34: #{model_forward.1} parent=11 // pred_check_branch
        %237 = sbr.rel (%p235) target = $region36
      $region35: #{model_forward.1} parent=11 // pred_region
        _
      $region36: #{model_forward.1} parent=11 // pred_fallthru
        _
    $region12: #{model_forward.1} parent=5 // pred_fallthru
      _
    %p238 = scmp.lt.s32.totalorder %s13, 2
    // Predicated region
    $region37: #{model_forward.1} parent=5 // pred_check
      %p239 = pneg %p238
    $region38: #{model_forward.1} parent=5 // pred_check_branch
      %241 = sbr.rel (%p239) target = $region40
    $region39: #{model_forward.1} parent=5 // pred_region
      // Predicated region
      $region41: #{model_forward.1} parent=39 // pred_check
        %p242 = pneg %p47
      $region42: #{model_forward.1} parent=39 // pred_check_branch
        %244 = sbr.rel (%p242) target = $region44
      $region43: #{model_forward.1} parent=39 // pred_region
        %s245 = smul.u32 8, %s21
        %p246 = scmp.lt.s32.totalorder %s20, 1
        %s247 = scalar_select %p246, %s20, 1
        %p248 = scmp.lt.s32.totalorder %s245, 7
        %s249 = scalar_select %p248, %s245, 7
        %s250 = smul.addr %s249, 2
        %s251 = smul.addr %s247, 16
        %s252 = sadd.s32 %s250, %s251
        %s253 = smul.addr %s252, 4
        %s254 = scalar_lea.vmem %s0, %s253
        %s255 = smul.u32 8, %s21
      $region44: #{model_forward.1} parent=39 // pred_fallthru
        _
    $region40: #{model_forward.1} parent=5 // pred_fallthru
      _
    %p256 = scmp.le.s32.totalorder 1, %s13
    %p257 = scmp.lt.s32.totalorder %s13, 3
    %p258 = pnand %p256, %p257
    %p259 = pneg %p258
    // Predicated region
    $region45: #{model_forward.1} parent=5 // pred_check
      _
    $region46: #{model_forward.1} parent=5 // pred_check_branch
      %261 = sbr.rel (%p258) target = $region48
    $region47: #{model_forward.1} parent=5 // pred_region
      %s262 = ssub.s32 %s13, 1
      %s263 = smul.u32 8, %s23
      %p264 = scmp.lt.s32.totalorder %s22, 1
      %s265 = scalar_select %p264, %s22, 1
      %p266 = scmp.lt.s32.totalorder %s263, 7
      %s267 = scalar_select %p266, %s263, 7
      %s268 = smul.addr %s267, 2
      %s269 = smul.addr %s265, 16
      %s270 = sadd.s32 %s268, %s269
      %s271 = smul.addr %s270, 4
      %s272 = scalar_lea.vmem %s0, %s271
      %p273 = pneg %p53
      %p274 = pneg %p50
      %p275 = pneg %p74
      %p276 = pneg %p71
      %p277 = pneg %p95
      %p278 = pneg %p92
      %p279 = pneg %p116
      %p280 = pneg %p113
      %p281 = pneg %p137
      %p282 = pneg %p134
      %p283 = pneg %p158
      %p284 = pneg %p155
      %p285 = pneg %p179
      %p286 = pneg %p176
      %p287 = pneg %p205
      %p288 = pneg %p202
      %p289 = scmp.lt.s32.totalorder %s22, 1
      %s290 = scalar_select %p289, %s22, 1
      %s291 = smul.addr %s290, 8
      %s292 = scalar_lea.vmem %s7, %s291
      %s293 = smul.u32 8, %s23
      %p294 = scmp.lt.s32.totalorder %s22, 1
      %s295 = scalar_select %p294, %s22, 1
      %p296 = scmp.lt.s32.totalorder %s293, 7
      %s297 = scalar_select %p296, %s293, 7
      %s298 = smul.addr %s297, 2
      %s299 = smul.addr %s295, 16
      %s300 = sadd.s32 %s298, %s299
      %s301 = smul.addr %s300, 4
      %s302 = scalar_lea.vmem %s0, %s301
      %s303 = smul.u32 8, %s23
      %p304 = scmp.lt.s32.totalorder %s22, 1
      %s305 = scalar_select %p304, %s22, 1
      %s306 = smul.addr %s305, 8
      %s307 = scalar_lea.vmem %s7, %s306
      %p309 = scmp.eq.s32.totalorder %s23, 0
      // Predicated region
      $region49: #{model_forward.1} parent=47 // pred_check
        %p310 = pneg %p309
      $region50: #{model_forward.1} parent=47 // pred_check_branch
        %312 = sbr.rel (%p310) target = $region52
      $region51: #{model_forward.1} parent=47 // pred_region
        %313 = vst [vmem:[#allocation2] sm:$0xff] 0.0
        %314 = vst [vmem:[#allocation2 + $0x8] sm:$0xff] 0.0
        %315 = vst [vmem:[#allocation2 + $0x10] sm:$0xff] 0.0
        %316 = vst [vmem:[#allocation2 + $0x18] sm:$0xff] 0.0
        %317 = vst [vmem:[#allocation2 + $0x20] sm:$0xff] 0.0
        %318 = vst [vmem:[#allocation2 + $0x28] sm:$0xff] 0.0
        %319 = vst [vmem:[#allocation2 + $0x30] sm:$0xff] 0.0
        %320 = vst [vmem:[#allocation2 + $0x38] sm:$0xff] 0.0
        %321 = vst [vmem:[#allocation3] sm:$0xff] 0.0
        %322 = vst [vmem:[#allocation3 + $0x8] sm:$0xff] 0.0
        %323 = vst [vmem:[#allocation3 + $0x10] sm:$0xff] 0.0
        %324 = vst [vmem:[#allocation3 + $0x18] sm:$0xff] 0.0
        %325 = vst [vmem:[#allocation3 + $0x20] sm:$0xff] 0.0
        %326 = vst [vmem:[#allocation3 + $0x28] sm:$0xff] 0.0
        %327 = vst [vmem:[#allocation3 + $0x30] sm:$0xff] 0.0
        %328 = vst [vmem:[#allocation3 + $0x38] sm:$0xff] 0.0
      $region52: #{model_forward.1} parent=47 // pred_fallthru
        _
      %v329 = vld [vmem:[%s302] sm:$0xff]
      %v330 = vld [vmem:[%s302 + $0x8] sm:$0xff]
      %v331 = vld [vmem:[%s302 + $0x10] sm:$0xff]
      %v332 = vld [vmem:[%s302 + $0x18] sm:$0xff]
      %v333 = vld [vmem:[%s302 + $0x20] sm:$0xff]
      %v334 = vld [vmem:[%s302 + $0x28] sm:$0xff]
      %v335 = vld [vmem:[%s302 + $0x30] sm:$0xff]
      %v336 = vld [vmem:[%s302 + $0x38] sm:$0xff]
      %v337 = vld [vmem:[%s1] sm:$0xf]
      %v338 = vld [vmem:[%s1 + $0x4] sm:$0xf]
      %v339 = vld [vmem:[%s1 + $0x8] sm:$0xf]
      %v340 = vld [vmem:[%s1 + $0xc] sm:$0xf]
      %v341 = vld [vmem:[%s1 + $0x10] sm:$0xf]
      %v342 = vld [vmem:[%s1 + $0x14] sm:$0xf]
      %v343 = vld [vmem:[%s1 + $0x18] sm:$0xf]
      %v344 = vld [vmem:[%s1 + $0x1c] sm:$0xf]
      %v345 = vld [vmem:[%s1 + $0x20] sm:$0xf]
      %v346 = vld [vmem:[%s1 + $0x24] sm:$0xf]
      %v347 = vld [vmem:[%s1 + $0x28] sm:$0xf]
      %v348 = vld [vmem:[%s1 + $0x2c] sm:$0xf]
      %v349 = vld [vmem:[%s1 + $0x30] sm:$0xf]
      %v350 = vld [vmem:[%s1 + $0x34] sm:$0xf]
      %v351 = vld [vmem:[%s1 + $0x38] sm:$0xf]
      %v352 = vld [vmem:[%s1 + $0x3c] sm:$0xf]
      %v353 = vld [vmem:[%s1 + $0x40] sm:$0xf]
      %v354 = vld [vmem:[%s1 + $0x44] sm:$0xf]
      %v355 = vld [vmem:[%s1 + $0x48] sm:$0xf]
      %v356 = vld [vmem:[%s1 + $0x4c] sm:$0xf]
      %v357 = vld [vmem:[%s1 + $0x50] sm:$0xf]
      %v358 = vld [vmem:[%s1 + $0x54] sm:$0xf]
      %v359 = vld [vmem:[%s1 + $0x58] sm:$0xf]
      %v360 = vld [vmem:[%s1 + $0x5c] sm:$0xf]
      %v361 = vld [vmem:[%s1 + $0x60] sm:$0xf]
      %v362 = vld [vmem:[%s1 + $0x64] sm:$0xf]
      %v363 = vld [vmem:[%s1 + $0x68] sm:$0xf]
      %v364 = vld [vmem:[%s1 + $0x6c] sm:$0xf]
      %v365 = vld [vmem:[%s1 + $0x70] sm:$0xf]
      %v366 = vld [vmem:[%s1 + $0x74] sm:$0xf]
      %v367 = vld [vmem:[%s1 + $0x78] sm:$0xf]
      %v368 = vld [vmem:[%s1 + $0x7c] sm:$0xf]
      %v369 = vld [vmem:[%s2] sm:$0x1]
      %v371 = vlaneseq
      %v372 = vshrl.u32 %v371, 7
      %v373 = vsub.s32 0, %v372
      %v374 = vrot.slane %v369, %v373
      %v384 = vunpack.c.l.b16 %v329
      %v385 = vunpack.c.h.b16 %v329
      %v386 = vunpack.c.l.b16 %v330
      %v387 = vunpack.c.h.b16 %v330
      %v388 = vunpack.c.l.b16 %v331
      %v389 = vunpack.c.h.b16 %v331
      %v390 = vunpack.c.l.b16 %v332
      %v391 = vunpack.c.h.b16 %v332
      %v392 = vunpack.c.l.b16 %v333
      %v393 = vunpack.c.h.b16 %v333
      %v394 = vunpack.c.l.b16 %v334
      %v395 = vunpack.c.h.b16 %v334
      %v396 = vunpack.c.l.b16 %v335
      %v397 = vunpack.c.h.b16 %v335
      %v398 = vunpack.c.l.b16 %v336
      %v399 = vunpack.c.h.b16 %v336
      %v400 = vpack.c.b16 %v386, %v384
      %v401 = vpack.c.b16 %v387, %v385
      %v402 = vpack.c.b16 %v390, %v388
      %v403 = vpack.c.b16 %v391, %v389
      %v404 = vpack.c.b16 %v394, %v392
      %v405 = vpack.c.b16 %v395, %v393
      %v406 = vpack.c.b16 %v398, %v396
      %v407 = vpack.c.b16 %v399, %v397
      %v448 = vunpack.c.l.b16 %v337
      %v449 = vunpack.c.l.b16 %v338
      %v450 = vunpack.c.l.b16 %v339
      %v451 = vunpack.c.l.b16 %v340
      %v452 = vunpack.c.l.b16 %v341
      %v453 = vunpack.c.l.b16 %v342
      %v454 = vunpack.c.l.b16 %v343
      %v455 = vunpack.c.l.b16 %v344
      %v456 = vunpack.c.l.b16 %v345
      %v457 = vunpack.c.l.b16 %v346
      %v458 = vunpack.c.l.b16 %v347
      %v459 = vunpack.c.l.b16 %v348
      %v460 = vunpack.c.l.b16 %v349
      %v461 = vunpack.c.l.b16 %v350
      %v462 = vunpack.c.l.b16 %v351
      %v463 = vunpack.c.l.b16 %v352
      %v464 = vunpack.c.l.b16 %v353
      %v465 = vunpack.c.l.b16 %v354
      %v466 = vunpack.c.l.b16 %v355
      %v467 = vunpack.c.l.b16 %v356
      %v468 = vunpack.c.l.b16 %v357
      %v469 = vunpack.c.l.b16 %v358
      %v470 = vunpack.c.l.b16 %v359
      %v471 = vunpack.c.l.b16 %v360
      %v472 = vunpack.c.l.b16 %v361
      %v473 = vunpack.c.l.b16 %v362
      %v474 = vunpack.c.l.b16 %v363
      %v475 = vunpack.c.l.b16 %v364
      %v476 = vunpack.c.l.b16 %v365
      %v477 = vunpack.c.l.b16 %v366
      %v478 = vunpack.c.l.b16 %v367
      %v479 = vunpack.c.l.b16 %v368
      %v480 = vpack.c.b16 %v449, %v448
      %v481 = vpack.c.b16 %v451, %v450
      %v482 = vpack.c.b16 %v453, %v452
      %v483 = vpack.c.b16 %v455, %v454
      %v484 = vpack.c.b16 %v457, %v456
      %v485 = vpack.c.b16 %v459, %v458
      %v486 = vpack.c.b16 %v461, %v460
      %v487 = vpack.c.b16 %v463, %v462
      %v488 = vpack.c.b16 %v465, %v464
      %v489 = vpack.c.b16 %v467, %v466
      %v490 = vpack.c.b16 %v469, %v468
      %v491 = vpack.c.b16 %v471, %v470
      %v492 = vpack.c.b16 %v473, %v472
      %v493 = vpack.c.b16 %v475, %v474
      %v494 = vpack.c.b16 %v477, %v476
      %v495 = vpack.c.b16 %v479, %v478
      %512 = vmatprep.subr.bf16.mxu0 0
      %513 = vmatpush1.bf16.msra.mxu0 %v487
      %514 = vmatprep.subr.bf16.mxu0 0
      %515 = vmatpush1.bf16.msra.mxu0 %v486
      %516 = vmatprep.subr.bf16.mxu0 0
      %517 = vmatpush1.bf16.msra.mxu0 %v485
      %518 = vmatprep.subr.bf16.mxu0 0
      %519 = vmatpush1.bf16.msra.mxu0 %v484
      %520 = vmatprep.subr.bf16.mxu0 0
      %521 = vmatpush1.bf16.msra.mxu0 %v483
      %522 = vmatprep.subr.bf16.mxu0 0
      %523 = vmatpush1.bf16.msra.mxu0 %v482
      %524 = vmatprep.subr.bf16.mxu0 0
      %525 = vmatpush1.bf16.msra.mxu0 %v481
      %526 = vmatprep.subr.bf16.mxu0 0
      %527 = vmatpush1.bf16.msra.mxu0 %v480
      %528 = vmatprep.subr.bf16.mxu0 0
      %529 = vmatpush2.bf16.msra.mxu0 %v495
      %530 = vmatprep.subr.bf16.mxu0 0
      %531 = vmatpush2.bf16.msra.mxu0 %v494
      %532 = vmatprep.subr.bf16.mxu0 0
      %533 = vmatpush2.bf16.msra.mxu0 %v493
      %534 = vmatprep.subr.bf16.mxu0 0
      %535 = vmatpush2.bf16.msra.mxu0 %v492
      %536 = vmatprep.subr.bf16.mxu0 0
      %537 = vmatpush2.bf16.msra.mxu0 %v491
      %538 = vmatprep.subr.bf16.mxu0 0
      %539 = vmatpush2.bf16.msra.mxu0 %v490
      %540 = vmatprep.subr.bf16.mxu0 0
      %541 = vmatpush2.bf16.msra.mxu0 %v489
      %542 = vmatprep.subr.bf16.mxu0 0
      %543 = vmatpush2.bf16.msra.mxu0 %v488
      %544 = vmatprep.mubr.bf16.mxu0 %v401
      %545 = vmatmul.mubr.bf16.gmra.mxu0 %v400
      %v546 = vpop.f32.mrf.mxu0
      %v547 = vadd.f32 %v374, %v546
      %v548 = vpop.f32.mrf.mxu0
      %v549 = vpop.f32.mrf.mxu0
      %v550 = vadd.f32 %v374, %v549
      %v551 = vpop.f32.mrf.mxu0
      %552 = vmatprep.mubr.bf16.mxu0 %v403
      %553 = vmatmul.mubr.bf16.gmra.mxu0 %v402
      %v554 = vpop.f32.mrf.mxu0
      %v555 = vadd.f32 %v374, %v554
      %v556 = vpop.f32.mrf.mxu0
      %v557 = vpop.f32.mrf.mxu0
      %v558 = vadd.f32 %v374, %v557
      %v559 = vpop.f32.mrf.mxu0
      %560 = vmatprep.mubr.bf16.mxu0 %v405
      %561 = vmatmul.mubr.bf16.gmra.mxu0 %v404
      %v562 = vpop.f32.mrf.mxu0
      %v563 = vadd.f32 %v374, %v562
      %v564 = vpop.f32.mrf.mxu0
      %v565 = vpop.f32.mrf.mxu0
      %v566 = vadd.f32 %v374, %v565
      %v567 = vpop.f32.mrf.mxu0
      %568 = vmatprep.mubr.bf16.mxu0 %v407
      %569 = vmatmul.mubr.bf16.gmra.mxu0 %v406
      %v570 = vpop.f32.mrf.mxu0
      %v571 = vadd.f32 %v374, %v570
      %v572 = vpop.f32.mrf.mxu0
      %v573 = vpop.f32.mrf.mxu0
      %v574 = vadd.f32 %v374, %v573
      %v575 = vpop.f32.mrf.mxu0
      %576 = vdwg.mxu0
      %v577 = vmax.f32 %v547, 0.0
      %v578 = vmax.f32 %v550, 0.0
      %v579 = vmax.f32 %v555, 0.0
      %v580 = vmax.f32 %v558, 0.0
      %v581 = vmax.f32 %v563, 0.0
      %v582 = vmax.f32 %v566, 0.0
      %v583 = vmax.f32 %v571, 0.0
      %v584 = vmax.f32 %v574, 0.0
      %v585 = vpack.c.bf16 %v578, %v577
      %v586 = vpack.c.bf16 %v580, %v579
      %v587 = vpack.c.bf16 %v582, %v581
      %v588 = vpack.c.bf16 %v584, %v583
      %v589 = vld [vmem:[%s3] sm:$0xff]
      %v590 = vld [vmem:[%s3 + $0x8] sm:$0xff]
      %v591 = vld [vmem:[%s3 + $0x10] sm:$0xff]
      %v592 = vld [vmem:[%s3 + $0x18] sm:$0xff]
      %v593 = vld [vmem:[%s3 + $0x20] sm:$0xff]
      %v594 = vld [vmem:[%s3 + $0x28] sm:$0xff]
      %v595 = vld [vmem:[%s3 + $0x30] sm:$0xff]
      %v596 = vld [vmem:[%s3 + $0x38] sm:$0xff]
      %v597 = vld [vmem:[%s3 + $0x40] sm:$0xff]
      %v598 = vld [vmem:[%s3 + $0x48] sm:$0xff]
      %v599 = vld [vmem:[%s3 + $0x50] sm:$0xff]
      %v600 = vld [vmem:[%s3 + $0x58] sm:$0xff]
      %v601 = vld [vmem:[%s3 + $0x60] sm:$0xff]
      %v602 = vld [vmem:[%s3 + $0x68] sm:$0xff]
      %v603 = vld [vmem:[%s3 + $0x70] sm:$0xff]
      %v604 = vld [vmem:[%s3 + $0x78] sm:$0xff]
      %v605 = vld [vmem:[%s3 + $0x80] sm:$0xff]
      %v606 = vld [vmem:[%s3 + $0x88] sm:$0xff]
      %v607 = vld [vmem:[%s3 + $0x90] sm:$0xff]
      %v608 = vld [vmem:[%s3 + $0x98] sm:$0xff]
      %v609 = vld [vmem:[%s3 + $0xa0] sm:$0xff]
      %v610 = vld [vmem:[%s3 + $0xa8] sm:$0xff]
      %v611 = vld [vmem:[%s3 + $0xb0] sm:$0xff]
      %v612 = vld [vmem:[%s3 + $0xb8] sm:$0xff]
      %v613 = vld [vmem:[%s3 + $0xc0] sm:$0xff]
      %v614 = vld [vmem:[%s3 + $0xc8] sm:$0xff]
      %v615 = vld [vmem:[%s3 + $0xd0] sm:$0xff]
      %v616 = vld [vmem:[%s3 + $0xd8] sm:$0xff]
      %v617 = vld [vmem:[%s3 + $0xe0] sm:$0xff]
      %v618 = vld [vmem:[%s3 + $0xe8] sm:$0xff]
      %v619 = vld [vmem:[%s3 + $0xf0] sm:$0xff]
      %v620 = vld [vmem:[%s3 + $0xf8] sm:$0xff]
      %v621 = vld [vmem:[%s4] sm:$0xff]
      %v623 = vlaneseq
      %v624 = vshrl.u32 %v623, 7
      %v625 = vsub.s32 0, %v624
      %v626 = vrot.slane %v621, %v625
      %v627 = vlaneseq
      %v628 = vshrl.u32 %v627, 7
      %v629 = vsub.s32 1, %v628
      %v630 = vrot.slane %v621, %v629
      %v631 = vlaneseq
      %v632 = vshrl.u32 %v631, 7
      %v633 = vsub.s32 2, %v632
      %v634 = vrot.slane %v621, %v633
      %v635 = vlaneseq
      %v636 = vshrl.u32 %v635, 7
      %v637 = vsub.s32 3, %v636
      %v638 = vrot.slane %v621, %v637
      %v639 = vlaneseq
      %v640 = vshrl.u32 %v639, 7
      %v641 = vsub.s32 4, %v640
      %v642 = vrot.slane %v621, %v641
      %v643 = vlaneseq
      %v644 = vshrl.u32 %v643, 7
      %v645 = vsub.s32 5, %v644
      %v646 = vrot.slane %v621, %v645
      %v647 = vlaneseq
      %v648 = vshrl.u32 %v647, 7
      %v649 = vsub.s32 6, %v648
      %v650 = vrot.slane %v621, %v649
      %v651 = vlaneseq
      %v652 = vshrl.u32 %v651, 7
      %v653 = vsub.s32 7, %v652
      %v654 = vrot.slane %v621, %v653
      %v695 = vunpack.c.l.b16 %v589
      %v696 = vunpack.c.h.b16 %v589
      %v697 = vunpack.c.l.b16 %v590
      %v698 = vunpack.c.h.b16 %v590
      %v699 = vunpack.c.l.b16 %v591
      %v700 = vunpack.c.h.b16 %v591
      %v701 = vunpack.c.l.b16 %v592
      %v702 = vunpack.c.h.b16 %v592
      %v703 = vunpack.c.l.b16 %v593
      %v704 = vunpack.c.h.b16 %v593
      %v705 = vunpack.c.l.b16 %v594
      %v706 = vunpack.c.h.b16 %v594
      %v707 = vunpack.c.l.b16 %v595
      %v708 = vunpack.c.h.b16 %v595
      %v709 = vunpack.c.l.b16 %v596
      %v710 = vunpack.c.h.b16 %v596
      %v711 = vunpack.c.l.b16 %v597
      %v712 = vunpack.c.h.b16 %v597
      %v713 = vunpack.c.l.b16 %v598
      %v714 = vunpack.c.h.b16 %v598
      %v715 = vunpack.c.l.b16 %v599
      %v716 = vunpack.c.h.b16 %v599
      %v717 = vunpack.c.l.b16 %v600
      %v718 = vunpack.c.h.b16 %v600
      %v719 = vunpack.c.l.b16 %v601
      %v720 = vunpack.c.h.b16 %v601
      %v721 = vunpack.c.l.b16 %v602
      %v722 = vunpack.c.h.b16 %v602
      %v723 = vunpack.c.l.b16 %v603
      %v724 = vunpack.c.h.b16 %v603
      %v725 = vunpack.c.l.b16 %v604
      %v726 = vunpack.c.h.b16 %v604
      %v727 = vunpack.c.l.b16 %v605
      %v728 = vunpack.c.h.b16 %v605
      %v729 = vunpack.c.l.b16 %v606
      %v730 = vunpack.c.h.b16 %v606
      %v731 = vunpack.c.l.b16 %v607
      %v732 = vunpack.c.h.b16 %v607
      %v733 = vunpack.c.l.b16 %v608
      %v734 = vunpack.c.h.b16 %v608
      %v735 = vunpack.c.l.b16 %v609
      %v736 = vunpack.c.h.b16 %v609
      %v737 = vunpack.c.l.b16 %v610
      %v738 = vunpack.c.h.b16 %v610
      %v739 = vunpack.c.l.b16 %v611
      %v740 = vunpack.c.h.b16 %v611
      %v741 = vunpack.c.l.b16 %v612
      %v742 = vunpack.c.h.b16 %v612
      %v743 = vunpack.c.l.b16 %v613
      %v744 = vunpack.c.h.b16 %v613
      %v745 = vunpack.c.l.b16 %v614
      %v746 = vunpack.c.h.b16 %v614
      %v747 = vunpack.c.l.b16 %v615
      %v748 = vunpack.c.h.b16 %v615
      %v749 = vunpack.c.l.b16 %v616
      %v750 = vunpack.c.h.b16 %v616
      %v751 = vunpack.c.l.b16 %v617
      %v752 = vunpack.c.h.b16 %v617
      %v753 = vunpack.c.l.b16 %v618
      %v754 = vunpack.c.h.b16 %v618
      %v755 = vunpack.c.l.b16 %v619
      %v756 = vunpack.c.h.b16 %v619
      %v757 = vunpack.c.l.b16 %v620
      %v758 = vunpack.c.h.b16 %v620
      %v759 = vpack.c.b16 %v703, %v695
      %v760 = vpack.c.b16 %v704, %v696
      %v761 = vpack.c.b16 %v705, %v697
      %v762 = vpack.c.b16 %v706, %v698
      %v763 = vpack.c.b16 %v707, %v699
      %v764 = vpack.c.b16 %v708, %v700
      %v765 = vpack.c.b16 %v709, %v701
      %v766 = vpack.c.b16 %v710, %v702
      %v767 = vpack.c.b16 %v719, %v711
      %v768 = vpack.c.b16 %v720, %v712
      %v769 = vpack.c.b16 %v721, %v713
      %v770 = vpack.c.b16 %v722, %v714
      %v771 = vpack.c.b16 %v723, %v715
      %v772 = vpack.c.b16 %v724, %v716
      %v773 = vpack.c.b16 %v725, %v717
      %v774 = vpack.c.b16 %v726, %v718
      %v775 = vpack.c.b16 %v735, %v727
      %v776 = vpack.c.b16 %v736, %v728
      %v777 = vpack.c.b16 %v737, %v729
      %v778 = vpack.c.b16 %v738, %v730
      %v779 = vpack.c.b16 %v739, %v731
      %v780 = vpack.c.b16 %v740, %v732
      %v781 = vpack.c.b16 %v741, %v733
      %v782 = vpack.c.b16 %v742, %v734
      %v783 = vpack.c.b16 %v751, %v743
      %v784 = vpack.c.b16 %v752, %v744
      %v785 = vpack.c.b16 %v753, %v745
      %v786 = vpack.c.b16 %v754, %v746
      %v787 = vpack.c.b16 %v755, %v747
      %v788 = vpack.c.b16 %v756, %v748
      %v789 = vpack.c.b16 %v757, %v749
      %v790 = vpack.c.b16 %v758, %v750
      %vm823 = vcmask 523264
      %v825 = vsel %vm823, %v585, 0
      %v828 = vsel %vm823, %v586, 0
      %v831 = vsel %vm823, %v587, 0
      %v834 = vsel %vm823, %v588, 0
      %836 = vmatprep.subr.bf16.mxu0 0
      %837 = vmatpush1.bf16.msra.mxu0 0
      %838 = vmatprep.subr.bf16.mxu0 0
      %839 = vmatpush1.bf16.msra.mxu0 0
      %840 = vmatprep.subr.bf16.mxu0 0
      %841 = vmatpush1.bf16.msra.mxu0 0
      %842 = vmatprep.subr.bf16.mxu0 0
      %843 = vmatpush1.bf16.msra.mxu0 0
      %844 = vmatprep.subr.bf16.mxu0 %v784
      %845 = vmatpush1.bf16.msra.mxu0 %v783
      %846 = vmatprep.subr.bf16.mxu0 %v776
      %847 = vmatpush1.bf16.msra.mxu0 %v775
      %848 = vmatprep.subr.bf16.mxu0 %v768
      %849 = vmatpush1.bf16.msra.mxu0 %v767
      %850 = vmatprep.subr.bf16.mxu0 %v760
      %851 = vmatpush1.bf16.msra.mxu0 %v759
      %852 = vmatprep.subr.bf16.mxu0 0
      %853 = vmatpush2.bf16.msra.mxu0 0
      %854 = vmatprep.subr.bf16.mxu0 0
      %855 = vmatpush2.bf16.msra.mxu0 0
      %856 = vmatprep.subr.bf16.mxu0 0
      %857 = vmatpush2.bf16.msra.mxu0 0
      %858 = vmatprep.subr.bf16.mxu0 0
      %859 = vmatpush2.bf16.msra.mxu0 0
      %860 = vmatprep.subr.bf16.mxu0 0
      %861 = vmatpush2.bf16.msra.mxu0 0
      %862 = vmatprep.subr.bf16.mxu0 0
      %863 = vmatpush2.bf16.msra.mxu0 0
      %864 = vmatprep.subr.bf16.mxu0 0
      %865 = vmatpush2.bf16.msra.mxu0 0
      %866 = vmatprep.subr.bf16.mxu0 0
      %867 = vmatpush2.bf16.msra.mxu0 0
      %868 = vmatprep.mubr.bf16.mxu0 0
      %869 = vmatmul.mubr.bf16.gmra.mxu0 %v825
      %v870 = vpop.f32.mrf.mxu0
      %v871 = vadd.f32 %v626, %v870
      %v872 = vpop.f32.mrf.mxu0
      %v873 = vadd.f32 %v630, %v872
      %v874 = vpop.f32.mrf.mxu0
      %v875 = vadd.f32 %v626, %v874
      %v876 = vpop.f32.mrf.mxu0
      %v877 = vadd.f32 %v630, %v876
      %878 = vmatprep.mubr.bf16.mxu0 0
      %879 = vmatmul.mubr.bf16.gmra.mxu0 %v828
      %v880 = vpop.f32.mrf.mxu0
      %v881 = vadd.f32 %v626, %v880
      %v882 = vpop.f32.mrf.mxu0
      %v883 = vadd.f32 %v630, %v882
      %v884 = vpop.f32.mrf.mxu0
      %v885 = vadd.f32 %v626, %v884
      %v886 = vpop.f32.mrf.mxu0
      %v887 = vadd.f32 %v630, %v886
      %888 = vmatprep.mubr.bf16.mxu0 0
      %889 = vmatmul.mubr.bf16.gmra.mxu0 %v831
      %v890 = vpop.f32.mrf.mxu0
      %v891 = vadd.f32 %v626, %v890
      %v892 = vpop.f32.mrf.mxu0
      %v893 = vadd.f32 %v630, %v892
      %v894 = vpop.f32.mrf.mxu0
      %v895 = vadd.f32 %v626, %v894
      %v896 = vpop.f32.mrf.mxu0
      %v897 = vadd.f32 %v630, %v896
      %898 = vmatprep.mubr.bf16.mxu0 0
      %899 = vmatmul.mubr.bf16.gmra.mxu0 %v834
      %v900 = vpop.f32.mrf.mxu0
      %v901 = vadd.f32 %v626, %v900
      %v902 = vpop.f32.mrf.mxu0
      %v903 = vadd.f32 %v630, %v902
      %v904 = vpop.f32.mrf.mxu0
      %v905 = vadd.f32 %v626, %v904
      %v906 = vpop.f32.mrf.mxu0
      %v907 = vadd.f32 %v630, %v906
      %908 = vdwg.mxu0
      %909 = vmatprep.subr.bf16.mxu0 0
      %910 = vmatpush1.bf16.msra.mxu0 0
      %911 = vmatprep.subr.bf16.mxu0 0
      %912 = vmatpush1.bf16.msra.mxu0 0
      %913 = vmatprep.subr.bf16.mxu0 0
      %914 = vmatpush1.bf16.msra.mxu0 0
      %915 = vmatprep.subr.bf16.mxu0 0
      %916 = vmatpush1.bf16.msra.mxu0 0
      %917 = vmatprep.subr.bf16.mxu0 %v786
      %918 = vmatpush1.bf16.msra.mxu0 %v785
      %919 = vmatprep.subr.bf16.mxu0 %v778
      %920 = vmatpush1.bf16.msra.mxu0 %v777
      %921 = vmatprep.subr.bf16.mxu0 %v770
      %922 = vmatpush1.bf16.msra.mxu0 %v769
      %923 = vmatprep.subr.bf16.mxu0 %v762
      %924 = vmatpush1.bf16.msra.mxu0 %v761
      %925 = vmatprep.subr.bf16.mxu0 0
      %926 = vmatpush2.bf16.msra.mxu0 0
      %927 = vmatprep.subr.bf16.mxu0 0
      %928 = vmatpush2.bf16.msra.mxu0 0
      %929 = vmatprep.subr.bf16.mxu0 0
      %930 = vmatpush2.bf16.msra.mxu0 0
      %931 = vmatprep.subr.bf16.mxu0 0
      %932 = vmatpush2.bf16.msra.mxu0 0
      %933 = vmatprep.subr.bf16.mxu0 0
      %934 = vmatpush2.bf16.msra.mxu0 0
      %935 = vmatprep.subr.bf16.mxu0 0
      %936 = vmatpush2.bf16.msra.mxu0 0
      %937 = vmatprep.subr.bf16.mxu0 0
      %938 = vmatpush2.bf16.msra.mxu0 0
      %939 = vmatprep.subr.bf16.mxu0 0
      %940 = vmatpush2.bf16.msra.mxu0 0
      %941 = vmatprep.mubr.bf16.mxu0 0
      %942 = vmatmul.mubr.bf16.gmra.mxu0 %v825
      %v943 = vpop.f32.mrf.mxu0
      %v944 = vadd.f32 %v634, %v943
      %v945 = vpop.f32.mrf.mxu0
      %v946 = vadd.f32 %v638, %v945
      %v947 = vpop.f32.mrf.mxu0
      %v948 = vadd.f32 %v634, %v947
      %v949 = vpop.f32.mrf.mxu0
      %v950 = vadd.f32 %v638, %v949
      %951 = vmatprep.mubr.bf16.mxu0 0
      %952 = vmatmul.mubr.bf16.gmra.mxu0 %v828
      %v953 = vpop.f32.mrf.mxu0
      %v954 = vadd.f32 %v634, %v953
      %v955 = vpop.f32.mrf.mxu0
      %v956 = vadd.f32 %v638, %v955
      %v957 = vpop.f32.mrf.mxu0
      %v958 = vadd.f32 %v634, %v957
      %v959 = vpop.f32.mrf.mxu0
      %v960 = vadd.f32 %v638, %v959
      %961 = vmatprep.mubr.bf16.mxu0 0
      %962 = vmatmul.mubr.bf16.gmra.mxu0 %v831
      %v963 = vpop.f32.mrf.mxu0
      %v964 = vadd.f32 %v634, %v963
      %v965 = vpop.f32.mrf.mxu0
      %v966 = vadd.f32 %v638, %v965
      %v967 = vpop.f32.mrf.mxu0
      %v968 = vadd.f32 %v634, %v967
      %v969 = vpop.f32.mrf.mxu0
      %v970 = vadd.f32 %v638, %v969
      %971 = vmatprep.mubr.bf16.mxu0 0
      %972 = vmatmul.mubr.bf16.gmra.mxu0 %v834
      %v973 = vpop.f32.mrf.mxu0
      %v974 = vadd.f32 %v634, %v973
      %v975 = vpop.f32.mrf.mxu0
      %v976 = vadd.f32 %v638, %v975
      %v977 = vpop.f32.mrf.mxu0
      %v978 = vadd.f32 %v634, %v977
      %v979 = vpop.f32.mrf.mxu0
      %v980 = vadd.f32 %v638, %v979
      %981 = vdwg.mxu0
      %982 = vmatprep.subr.bf16.mxu0 0
      %983 = vmatpush1.bf16.msra.mxu0 0
      %984 = vmatprep.subr.bf16.mxu0 0
      %985 = vmatpush1.bf16.msra.mxu0 0
      %986 = vmatprep.subr.bf16.mxu0 0
      %987 = vmatpush1.bf16.msra.mxu0 0
      %988 = vmatprep.subr.bf16.mxu0 0
      %989 = vmatpush1.bf16.msra.mxu0 0
      %990 = vmatprep.subr.bf16.mxu0 %v788
      %991 = vmatpush1.bf16.msra.mxu0 %v787
      %992 = vmatprep.subr.bf16.mxu0 %v780
      %993 = vmatpush1.bf16.msra.mxu0 %v779
      %994 = vmatprep.subr.bf16.mxu0 %v772
      %995 = vmatpush1.bf16.msra.mxu0 %v771
      %996 = vmatprep.subr.bf16.mxu0 %v764
      %997 = vmatpush1.bf16.msra.mxu0 %v763
      %998 = vmatprep.subr.bf16.mxu0 0
      %999 = vmatpush2.bf16.msra.mxu0 0
      %1000 = vmatprep.subr.bf16.mxu0 0
      %1001 = vmatpush2.bf16.msra.mxu0 0
      %1002 = vmatprep.subr.bf16.mxu0 0
      %1003 = vmatpush2.bf16.msra.mxu0 0
      %1004 = vmatprep.subr.bf16.mxu0 0
      %1005 = vmatpush2.bf16.msra.mxu0 0
      %1006 = vmatprep.subr.bf16.mxu0 0
      %1007 = vmatpush2.bf16.msra.mxu0 0
      %1008 = vmatprep.subr.bf16.mxu0 0
      %1009 = vmatpush2.bf16.msra.mxu0 0
      %1010 = vmatprep.subr.bf16.mxu0 0
      %1011 = vmatpush2.bf16.msra.mxu0 0
      %1012 = vmatprep.subr.bf16.mxu0 0
      %1013 = vmatpush2.bf16.msra.mxu0 0
      %1014 = vmatprep.mubr.bf16.mxu0 0
      %1015 = vmatmul.mubr.bf16.gmra.mxu0 %v825
      %v1016 = vpop.f32.mrf.mxu0
      %v1017 = vadd.f32 %v642, %v1016
      %v1018 = vpop.f32.mrf.mxu0
      %v1019 = vadd.f32 %v646, %v1018
      %v1020 = vpop.f32.mrf.mxu0
      %v1021 = vadd.f32 %v642, %v1020
      %v1022 = vpop.f32.mrf.mxu0
      %v1023 = vadd.f32 %v646, %v1022
      %1024 = vmatprep.mubr.bf16.mxu0 0
      %1025 = vmatmul.mubr.bf16.gmra.mxu0 %v828
      %v1026 = vpop.f32.mrf.mxu0
      %v1027 = vadd.f32 %v642, %v1026
      %v1028 = vpop.f32.mrf.mxu0
      %v1029 = vadd.f32 %v646, %v1028
      %v1030 = vpop.f32.mrf.mxu0
      %v1031 = vadd.f32 %v642, %v1030
      %v1032 = vpop.f32.mrf.mxu0
      %v1033 = vadd.f32 %v646, %v1032
      %1034 = vmatprep.mubr.bf16.mxu0 0
      %1035 = vmatmul.mubr.bf16.gmra.mxu0 %v831
      %v1036 = vpop.f32.mrf.mxu0
      %v1037 = vadd.f32 %v642, %v1036
      %v1038 = vpop.f32.mrf.mxu0
      %v1039 = vadd.f32 %v646, %v1038
      %v1040 = vpop.f32.mrf.mxu0
      %v1041 = vadd.f32 %v642, %v1040
      %v1042 = vpop.f32.mrf.mxu0
      %v1043 = vadd.f32 %v646, %v1042
      %1044 = vmatprep.mubr.bf16.mxu0 0
      %1045 = vmatmul.mubr.bf16.gmra.mxu0 %v834
      %v1046 = vpop.f32.mrf.mxu0
      %v1047 = vadd.f32 %v642, %v1046
      %v1048 = vpop.f32.mrf.mxu0
      %v1049 = vadd.f32 %v646, %v1048
      %v1050 = vpop.f32.mrf.mxu0
      %v1051 = vadd.f32 %v642, %v1050
      %v1052 = vpop.f32.mrf.mxu0
      %v1053 = vadd.f32 %v646, %v1052
      %1054 = vdwg.mxu0
      %1055 = vmatprep.subr.bf16.mxu0 0
      %1056 = vmatpush1.bf16.msra.mxu0 0
      %1057 = vmatprep.subr.bf16.mxu0 0
      %1058 = vmatpush1.bf16.msra.mxu0 0
      %1059 = vmatprep.subr.bf16.mxu0 0
      %1060 = vmatpush1.bf16.msra.mxu0 0
      %1061 = vmatprep.subr.bf16.mxu0 0
      %1062 = vmatpush1.bf16.msra.mxu0 0
      %1063 = vmatprep.subr.bf16.mxu0 %v790
      %1064 = vmatpush1.bf16.msra.mxu0 %v789
      %1065 = vmatprep.subr.bf16.mxu0 %v782
      %1066 = vmatpush1.bf16.msra.mxu0 %v781
      %1067 = vmatprep.subr.bf16.mxu0 %v774
      %1068 = vmatpush1.bf16.msra.mxu0 %v773
      %1069 = vmatprep.subr.bf16.mxu0 %v766
      %1070 = vmatpush1.bf16.msra.mxu0 %v765
      %1071 = vmatprep.subr.bf16.mxu0 0
      %1072 = vmatpush2.bf16.msra.mxu0 0
      %1073 = vmatprep.subr.bf16.mxu0 0
      %1074 = vmatpush2.bf16.msra.mxu0 0
      %1075 = vmatprep.subr.bf16.mxu0 0
      %1076 = vmatpush2.bf16.msra.mxu0 0
      %1077 = vmatprep.subr.bf16.mxu0 0
      %1078 = vmatpush2.bf16.msra.mxu0 0
      %1079 = vmatprep.subr.bf16.mxu0 0
      %1080 = vmatpush2.bf16.msra.mxu0 0
      %1081 = vmatprep.subr.bf16.mxu0 0
      %1082 = vmatpush2.bf16.msra.mxu0 0
      %1083 = vmatprep.subr.bf16.mxu0 0
      %1084 = vmatpush2.bf16.msra.mxu0 0
      %1085 = vmatprep.subr.bf16.mxu0 0
      %1086 = vmatpush2.bf16.msra.mxu0 0
      %1087 = vmatprep.mubr.bf16.mxu0 0
      %1088 = vmatmul.mubr.bf16.gmra.mxu0 %v825
      %v1089 = vpop.f32.mrf.mxu0
      %v1090 = vadd.f32 %v650, %v1089
      %v1091 = vpop.f32.mrf.mxu0
      %v1092 = vadd.f32 %v654, %v1091
      %v1093 = vpop.f32.mrf.mxu0
      %v1094 = vadd.f32 %v650, %v1093
      %v1095 = vpop.f32.mrf.mxu0
      %v1096 = vadd.f32 %v654, %v1095
      %1097 = vmatprep.mubr.bf16.mxu0 0
      %1098 = vmatmul.mubr.bf16.gmra.mxu0 %v828
      %v1099 = vpop.f32.mrf.mxu0
      %v1100 = vadd.f32 %v650, %v1099
      %v1101 = vpop.f32.mrf.mxu0
      %v1102 = vadd.f32 %v654, %v1101
      %v1103 = vpop.f32.mrf.mxu0
      %v1104 = vadd.f32 %v650, %v1103
      %v1105 = vpop.f32.mrf.mxu0
      %v1106 = vadd.f32 %v654, %v1105
      %1107 = vmatprep.mubr.bf16.mxu0 0
      %1108 = vmatmul.mubr.bf16.gmra.mxu0 %v831
      %v1109 = vpop.f32.mrf.mxu0
      %v1110 = vadd.f32 %v650, %v1109
      %v1111 = vpop.f32.mrf.mxu0
      %v1112 = vadd.f32 %v654, %v1111
      %v1113 = vpop.f32.mrf.mxu0
      %v1114 = vadd.f32 %v650, %v1113
      %v1115 = vpop.f32.mrf.mxu0
      %v1116 = vadd.f32 %v654, %v1115
      %1117 = vmatprep.mubr.bf16.mxu0 0
      %1118 = vmatmul.mubr.bf16.gmra.mxu0 %v834
      %v1119 = vpop.f32.mrf.mxu0
      %v1120 = vadd.f32 %v650, %v1119
      %v1121 = vpop.f32.mrf.mxu0
      %v1122 = vadd.f32 %v654, %v1121
      %v1123 = vpop.f32.mrf.mxu0
      %v1124 = vadd.f32 %v650, %v1123
      %v1125 = vpop.f32.mrf.mxu0
      %v1126 = vadd.f32 %v654, %v1125
      %1127 = vdwg.mxu0
      %v1128 = vmax.f32 %v871, 0.0
      %v1129 = vmax.f32 %v873, 0.0
      %v1130 = vmax.f32 %v944, 0.0
      %v1131 = vmax.f32 %v946, 0.0
      %v1132 = vmax.f32 %v1017, 0.0
      %v1133 = vmax.f32 %v1019, 0.0
      %v1134 = vmax.f32 %v1090, 0.0
      %v1135 = vmax.f32 %v1092, 0.0
      %v1136 = vmax.f32 %v875, 0.0
      %v1137 = vmax.f32 %v877, 0.0
      %v1138 = vmax.f32 %v948, 0.0
      %v1139 = vmax.f32 %v950, 0.0
      %v1140 = vmax.f32 %v1021, 0.0
      %v1141 = vmax.f32 %v1023, 0.0
      %v1142 = vmax.f32 %v1094, 0.0
      %v1143 = vmax.f32 %v1096, 0.0
      %v1144 = vmax.f32 %v881, 0.0
      %v1145 = vmax.f32 %v883, 0.0
      %v1146 = vmax.f32 %v954, 0.0
      %v1147 = vmax.f32 %v956, 0.0
      %v1148 = vmax.f32 %v1027, 0.0
      %v1149 = vmax.f32 %v1029, 0.0
      %v1150 = vmax.f32 %v1100, 0.0
      %v1151 = vmax.f32 %v1102, 0.0
      %v1152 = vmax.f32 %v885, 0.0
      %v1153 = vmax.f32 %v887, 0.0
      %v1154 = vmax.f32 %v958, 0.0
      %v1155 = vmax.f32 %v960, 0.0
      %v1156 = vmax.f32 %v1031, 0.0
      %v1157 = vmax.f32 %v1033, 0.0
      %v1158 = vmax.f32 %v1104, 0.0
      %v1159 = vmax.f32 %v1106, 0.0
      %v1160 = vmax.f32 %v891, 0.0
      %v1161 = vmax.f32 %v893, 0.0
      %v1162 = vmax.f32 %v964, 0.0
      %v1163 = vmax.f32 %v966, 0.0
      %v1164 = vmax.f32 %v1037, 0.0
      %v1165 = vmax.f32 %v1039, 0.0
      %v1166 = vmax.f32 %v1110, 0.0
      %v1167 = vmax.f32 %v1112, 0.0
      %v1168 = vmax.f32 %v895, 0.0
      %v1169 = vmax.f32 %v897, 0.0
      %v1170 = vmax.f32 %v968, 0.0
      %v1171 = vmax.f32 %v970, 0.0
      %v1172 = vmax.f32 %v1041, 0.0
      %v1173 = vmax.f32 %v1043, 0.0
      %v1174 = vmax.f32 %v1114, 0.0
      %v1175 = vmax.f32 %v1116, 0.0
      %v1176 = vmax.f32 %v901, 0.0
      %v1177 = vmax.f32 %v903, 0.0
      %v1178 = vmax.f32 %v974, 0.0
      %v1179 = vmax.f32 %v976, 0.0
      %v1180 = vmax.f32 %v1047, 0.0
      %v1181 = vmax.f32 %v1049, 0.0
      %v1182 = vmax.f32 %v1120, 0.0
      %v1183 = vmax.f32 %v1122, 0.0
      %v1184 = vmax.f32 %v905, 0.0
      %v1185 = vmax.f32 %v907, 0.0
      %v1186 = vmax.f32 %v978, 0.0
      %v1187 = vmax.f32 %v980, 0.0
      %v1188 = vmax.f32 %v1051, 0.0
      %v1189 = vmax.f32 %v1053, 0.0
      %v1190 = vmax.f32 %v1124, 0.0
      %v1191 = vmax.f32 %v1126, 0.0
      %p1192 = scmp.lt.s32.totalorder %s23, 0
      // Predicated region
      $region53: #{model_forward.1} parent=47 // pred_check
        %p1193 = pneg %p1192
      $region54: #{model_forward.1} parent=47 // pred_check_branch
        %1195 = sbr.rel (%p1193) target = $region56
      $region55: #{model_forward.1} parent=47 // pred_region
        %v1196 = vld [vmem:[#allocation2] sm:$0xff]
        %v1197 = vld [vmem:[#allocation2 + $0x8] sm:$0xff]
        %v1198 = vld [vmem:[#allocation2 + $0x10] sm:$0xff]
        %v1199 = vld [vmem:[#allocation2 + $0x18] sm:$0xff]
        %v1200 = vld [vmem:[#allocation2 + $0x20] sm:$0xff]
        %v1201 = vld [vmem:[#allocation2 + $0x28] sm:$0xff]
        %v1202 = vld [vmem:[#allocation2 + $0x30] sm:$0xff]
        %v1203 = vld [vmem:[#allocation2 + $0x38] sm:$0xff]
        %v1204 = vadd.f32 %v1128, %v1136
        %v1205 = vadd.f32 %v1204, %v1144
        %v1206 = vadd.f32 %v1205, %v1152
        %v1207 = vadd.f32 %v1206, %v1160
        %v1208 = vadd.f32 %v1207, %v1168
        %v1209 = vadd.f32 %v1208, %v1176
        %v1210 = vadd.f32 %v1209, %v1184
        %v1211 = vadd.f32 %v1129, %v1137
        %v1212 = vadd.f32 %v1211, %v1145
        %v1213 = vadd.f32 %v1212, %v1153
        %v1214 = vadd.f32 %v1213, %v1161
        %v1215 = vadd.f32 %v1214, %v1169
        %v1216 = vadd.f32 %v1215, %v1177
        %v1217 = vadd.f32 %v1216, %v1185
        %v1218 = vadd.f32 %v1130, %v1138
        %v1219 = vadd.f32 %v1218, %v1146
        %v1220 = vadd.f32 %v1219, %v1154
        %v1221 = vadd.f32 %v1220, %v1162
        %v1222 = vadd.f32 %v1221, %v1170
        %v1223 = vadd.f32 %v1222, %v1178
        %v1224 = vadd.f32 %v1223, %v1186
        %v1225 = vadd.f32 %v1131, %v1139
        %v1226 = vadd.f32 %v1225, %v1147
        %v1227 = vadd.f32 %v1226, %v1155
        %v1228 = vadd.f32 %v1227, %v1163
        %v1229 = vadd.f32 %v1228, %v1171
        %v1230 = vadd.f32 %v1229, %v1179
        %v1231 = vadd.f32 %v1230, %v1187
        %v1232 = vadd.f32 %v1132, %v1140
        %v1233 = vadd.f32 %v1232, %v1148
        %v1234 = vadd.f32 %v1233, %v1156
        %v1235 = vadd.f32 %v1234, %v1164
        %v1236 = vadd.f32 %v1235, %v1172
        %v1237 = vadd.f32 %v1236, %v1180
        %v1238 = vadd.f32 %v1237, %v1188
        %v1239 = vadd.f32 %v1133, %v1141
        %v1240 = vadd.f32 %v1239, %v1149
        %v1241 = vadd.f32 %v1240, %v1157
        %v1242 = vadd.f32 %v1241, %v1165
        %v1243 = vadd.f32 %v1242, %v1173
        %v1244 = vadd.f32 %v1243, %v1181
        %v1245 = vadd.f32 %v1244, %v1189
        %v1246 = vadd.f32 %v1134, %v1142
        %v1247 = vadd.f32 %v1246, %v1150
        %v1248 = vadd.f32 %v1247, %v1158
        %v1249 = vadd.f32 %v1248, %v1166
        %v1250 = vadd.f32 %v1249, %v1174
        %v1251 = vadd.f32 %v1250, %v1182
        %v1252 = vadd.f32 %v1251, %v1190
        %v1253 = vadd.f32 %v1135, %v1143
        %v1254 = vadd.f32 %v1253, %v1151
        %v1255 = vadd.f32 %v1254, %v1159
        %v1256 = vadd.f32 %v1255, %v1167
        %v1257 = vadd.f32 %v1256, %v1175
        %v1258 = vadd.f32 %v1257, %v1183
        %v1259 = vadd.f32 %v1258, %v1191
        %v1260 = vadd.f32 %v1196, %v1210
        %v1261 = vadd.f32 %v1197, %v1217
        %v1262 = vadd.f32 %v1198, %v1224
        %v1263 = vadd.f32 %v1199, %v1231
        %v1264 = vadd.f32 %v1200, %v1238
        %v1265 = vadd.f32 %v1201, %v1245
        %v1266 = vadd.f32 %v1202, %v1252
        %v1267 = vadd.f32 %v1203, %v1259
        %1268 = vst [vmem:[#allocation2] sm:$0xff] %v1260
        %1269 = vst [vmem:[#allocation2 + $0x8] sm:$0xff] %v1261
        %1270 = vst [vmem:[#allocation2 + $0x10] sm:$0xff] %v1262
        %1271 = vst [vmem:[#allocation2 + $0x18] sm:$0xff] %v1263
        %1272 = vst [vmem:[#allocation2 + $0x20] sm:$0xff] %v1264
        %1273 = vst [vmem:[#allocation2 + $0x28] sm:$0xff] %v1265
        %1274 = vst [vmem:[#allocation2 + $0x30] sm:$0xff] %v1266
        %1275 = vst [vmem:[#allocation2 + $0x38] sm:$0xff] %v1267
        %v1276 = vld [vmem:[#allocation3] sm:$0xff]
        %v1277 = vld [vmem:[#allocation3 + $0x8] sm:$0xff]
        %v1278 = vld [vmem:[#allocation3 + $0x10] sm:$0xff]
        %v1279 = vld [vmem:[#allocation3 + $0x18] sm:$0xff]
        %v1280 = vld [vmem:[#allocation3 + $0x20] sm:$0xff]
        %v1281 = vld [vmem:[#allocation3 + $0x28] sm:$0xff]
        %v1282 = vld [vmem:[#allocation3 + $0x30] sm:$0xff]
        %v1283 = vld [vmem:[#allocation3 + $0x38] sm:$0xff]
        %v1284 = vmax.f32 %v1128, %v1136
        %v1285 = vmax.f32 %v1284, %v1144
        %v1286 = vmax.f32 %v1285, %v1152
        %v1287 = vmax.f32 %v1286, %v1160
        %v1288 = vmax.f32 %v1287, %v1168
        %v1289 = vmax.f32 %v1288, %v1176
        %v1290 = vmax.f32 %v1289, %v1184
        %v1291 = vmax.f32 %v1129, %v1137
        %v1292 = vmax.f32 %v1291, %v1145
        %v1293 = vmax.f32 %v1292, %v1153
        %v1294 = vmax.f32 %v1293, %v1161
        %v1295 = vmax.f32 %v1294, %v1169
        %v1296 = vmax.f32 %v1295, %v1177
        %v1297 = vmax.f32 %v1296, %v1185
        %v1298 = vmax.f32 %v1130, %v1138
        %v1299 = vmax.f32 %v1298, %v1146
        %v1300 = vmax.f32 %v1299, %v1154
        %v1301 = vmax.f32 %v1300, %v1162
        %v1302 = vmax.f32 %v1301, %v1170
        %v1303 = vmax.f32 %v1302, %v1178
        %v1304 = vmax.f32 %v1303, %v1186
        %v1305 = vmax.f32 %v1131, %v1139
        %v1306 = vmax.f32 %v1305, %v1147
        %v1307 = vmax.f32 %v1306, %v1155
        %v1308 = vmax.f32 %v1307, %v1163
        %v1309 = vmax.f32 %v1308, %v1171
        %v1310 = vmax.f32 %v1309, %v1179
        %v1311 = vmax.f32 %v1310, %v1187
        %v1312 = vmax.f32 %v1132, %v1140
        %v1313 = vmax.f32 %v1312, %v1148
        %v1314 = vmax.f32 %v1313, %v1156
        %v1315 = vmax.f32 %v1314, %v1164
        %v1316 = vmax.f32 %v1315, %v1172
        %v1317 = vmax.f32 %v1316, %v1180
        %v1318 = vmax.f32 %v1317, %v1188
        %v1319 = vmax.f32 %v1133, %v1141
        %v1320 = vmax.f32 %v1319, %v1149
        %v1321 = vmax.f32 %v1320, %v1157
        %v1322 = vmax.f32 %v1321, %v1165
        %v1323 = vmax.f32 %v1322, %v1173
        %v1324 = vmax.f32 %v1323, %v1181
        %v1325 = vmax.f32 %v1324, %v1189
        %v1326 = vmax.f32 %v1134, %v1142
        %v1327 = vmax.f32 %v1326, %v1150
        %v1328 = vmax.f32 %v1327, %v1158
        %v1329 = vmax.f32 %v1328, %v1166
        %v1330 = vmax.f32 %v1329, %v1174
        %v1331 = vmax.f32 %v1330, %v1182
        %v1332 = vmax.f32 %v1331, %v1190
        %v1333 = vmax.f32 %v1135, %v1143
        %v1334 = vmax.f32 %v1333, %v1151
        %v1335 = vmax.f32 %v1334, %v1159
        %v1336 = vmax.f32 %v1335, %v1167
        %v1337 = vmax.f32 %v1336, %v1175
        %v1338 = vmax.f32 %v1337, %v1183
        %v1339 = vmax.f32 %v1338, %v1191
        %v1340 = vmax.f32 %v1276, %v1290
        %v1341 = vmax.f32 %v1277, %v1297
        %v1342 = vmax.f32 %v1278, %v1304
        %v1343 = vmax.f32 %v1279, %v1311
        %v1344 = vmax.f32 %v1280, %v1318
        %v1345 = vmax.f32 %v1281, %v1325
        %v1346 = vmax.f32 %v1282, %v1332
        %v1347 = vmax.f32 %v1283, %v1339
        %1348 = vst [vmem:[#allocation3] sm:$0xff] %v1340
        %1349 = vst [vmem:[#allocation3 + $0x8] sm:$0xff] %v1341
        %1350 = vst [vmem:[#allocation3 + $0x10] sm:$0xff] %v1342
        %1351 = vst [vmem:[#allocation3 + $0x18] sm:$0xff] %v1343
        %1352 = vst [vmem:[#allocation3 + $0x20] sm:$0xff] %v1344
        %1353 = vst [vmem:[#allocation3 + $0x28] sm:$0xff] %v1345
        %1354 = vst [vmem:[#allocation3 + $0x30] sm:$0xff] %v1346
        %1355 = vst [vmem:[#allocation3 + $0x38] sm:$0xff] %v1347
      $region56: #{model_forward.1} parent=47 // pred_fallthru
        _
      // Predicated region
      $region57: #{model_forward.1} parent=47 // pred_check
        %p1356 = pneg %p309
      $region58: #{model_forward.1} parent=47 // pred_check_branch
        %1358 = sbr.rel (%p1356) target = $region60
      $region59: #{model_forward.1} parent=47 // pred_region
        %s1359 = smul.u32 %s23, 64
        %v1360 = vlaneseq
        %v1361 = vshrl.u32 %v1360, 7
        %v1362 = vadd.s32 %v1361, 8
        %v1363 = vadd.s32 %v1361, 16
        %v1364 = vadd.s32 %v1361, 24
        %v1365 = vadd.s32 %v1361, 32
        %v1366 = vadd.s32 %v1361, 40
        %v1367 = vadd.s32 %v1361, 48
        %v1368 = vadd.s32 %v1361, 56
        %v1369 = vstv %s1359
        %v1370 = vadd.s32 %v1369, %v1361
        %v1371 = vadd.s32 %v1369, %v1362
        %v1372 = vadd.s32 %v1369, %v1363
        %v1373 = vadd.s32 %v1369, %v1364
        %v1374 = vadd.s32 %v1369, %v1365
        %v1375 = vadd.s32 %v1369, %v1366
        %v1376 = vadd.s32 %v1369, %v1367
        %v1377 = vadd.s32 %v1369, %v1368
        %vm1378 = vcmp.lt.s32.totalorder %v1370, 64
        %vm1379 = vcmp.lt.s32.totalorder %v1371, 64
        %vm1380 = vcmp.lt.s32.totalorder %v1372, 64
        %vm1381 = vcmp.lt.s32.totalorder %v1373, 64
        %vm1382 = vcmp.lt.s32.totalorder %v1374, 64
        %vm1383 = vcmp.lt.s32.totalorder %v1375, 64
        %vm1384 = vcmp.lt.s32.totalorder %v1376, 64
        %vm1385 = vcmp.lt.s32.totalorder %v1377, 64
        %v1386 = vsel %vm1378, 1, 0
        %v1387 = vsel %vm1379, 1, 0
        %v1388 = vsel %vm1380, 1, 0
        %v1389 = vsel %vm1381, 1, 0
        %v1390 = vsel %vm1382, 1, 0
        %v1391 = vsel %vm1383, 1, 0
        %v1392 = vsel %vm1384, 1, 0
        %v1393 = vsel %vm1385, 1, 0
        %vm1394 = vcmp.eq.s32.totalorder %v1386, 1
        %vm1395 = vcmp.eq.s32.totalorder %v1387, 1
        %vm1396 = vcmp.eq.s32.totalorder %v1388, 1
        %vm1397 = vcmp.eq.s32.totalorder %v1389, 1
        %vm1398 = vcmp.eq.s32.totalorder %v1390, 1
        %vm1399 = vcmp.eq.s32.totalorder %v1391, 1
        %vm1400 = vcmp.eq.s32.totalorder %v1392, 1
        %vm1401 = vcmp.eq.s32.totalorder %v1393, 1
        %v1402 = vsel %vm1394, %v1128, 0.0
        %v1403 = vsel %vm1394, %v1129, 0.0
        %v1404 = vsel %vm1394, %v1130, 0.0
        %v1405 = vsel %vm1394, %v1131, 0.0
        %v1406 = vsel %vm1394, %v1132, 0.0
        %v1407 = vsel %vm1394, %v1133, 0.0
        %v1408 = vsel %vm1394, %v1134, 0.0
        %v1409 = vsel %vm1394, %v1135, 0.0
        %v1410 = vsel %vm1395, %v1136, 0.0
        %v1411 = vsel %vm1395, %v1137, 0.0
        %v1412 = vsel %vm1395, %v1138, 0.0
        %v1413 = vsel %vm1395, %v1139, 0.0
        %v1414 = vsel %vm1395, %v1140, 0.0
        %v1415 = vsel %vm1395, %v1141, 0.0
        %v1416 = vsel %vm1395, %v1142, 0.0
        %v1417 = vsel %vm1395, %v1143, 0.0
        %v1418 = vsel %vm1396, %v1144, 0.0
        %v1419 = vsel %vm1396, %v1145, 0.0
        %v1420 = vsel %vm1396, %v1146, 0.0
        %v1421 = vsel %vm1396, %v1147, 0.0
        %v1422 = vsel %vm1396, %v1148, 0.0
        %v1423 = vsel %vm1396, %v1149, 0.0
        %v1424 = vsel %vm1396, %v1150, 0.0
        %v1425 = vsel %vm1396, %v1151, 0.0
        %v1426 = vsel %vm1397, %v1152, 0.0
        %v1427 = vsel %vm1397, %v1153, 0.0
        %v1428 = vsel %vm1397, %v1154, 0.0
        %v1429 = vsel %vm1397, %v1155, 0.0
        %v1430 = vsel %vm1397, %v1156, 0.0
        %v1431 = vsel %vm1397, %v1157, 0.0
        %v1432 = vsel %vm1397, %v1158, 0.0
        %v1433 = vsel %vm1397, %v1159, 0.0
        %v1434 = vsel %vm1398, %v1160, 0.0
        %v1435 = vsel %vm1398, %v1161, 0.0
        %v1436 = vsel %vm1398, %v1162, 0.0
        %v1437 = vsel %vm1398, %v1163, 0.0
        %v1438 = vsel %vm1398, %v1164, 0.0
        %v1439 = vsel %vm1398, %v1165, 0.0
        %v1440 = vsel %vm1398, %v1166, 0.0
        %v1441 = vsel %vm1398, %v1167, 0.0
        %v1442 = vsel %vm1399, %v1168, 0.0
        %v1443 = vsel %vm1399, %v1169, 0.0
        %v1444 = vsel %vm1399, %v1170, 0.0
        %v1445 = vsel %vm1399, %v1171, 0.0
        %v1446 = vsel %vm1399, %v1172, 0.0
        %v1447 = vsel %vm1399, %v1173, 0.0
        %v1448 = vsel %vm1399, %v1174, 0.0
        %v1449 = vsel %vm1399, %v1175, 0.0
        %v1450 = vsel %vm1400, %v1176, 0.0
        %v1451 = vsel %vm1400, %v1177, 0.0
        %v1452 = vsel %vm1400, %v1178, 0.0
        %v1453 = vsel %vm1400, %v1179, 0.0
        %v1454 = vsel %vm1400, %v1180, 0.0
        %v1455 = vsel %vm1400, %v1181, 0.0
        %v1456 = vsel %vm1400, %v1182, 0.0
        %v1457 = vsel %vm1400, %v1183, 0.0
        %v1458 = vsel %vm1401, %v1184, 0.0
        %v1459 = vsel %vm1401, %v1185, 0.0
        %v1460 = vsel %vm1401, %v1186, 0.0
        %v1461 = vsel %vm1401, %v1187, 0.0
        %v1462 = vsel %vm1401, %v1188, 0.0
        %v1463 = vsel %vm1401, %v1189, 0.0
        %v1464 = vsel %vm1401, %v1190, 0.0
        %v1465 = vsel %vm1401, %v1191, 0.0
        %v1466 = vld [vmem:[#allocation2] sm:$0xff]
        %v1467 = vld [vmem:[#allocation2 + $0x8] sm:$0xff]
        %v1468 = vld [vmem:[#allocation2 + $0x10] sm:$0xff]
        %v1469 = vld [vmem:[#allocation2 + $0x18] sm:$0xff]
        %v1470 = vld [vmem:[#allocation2 + $0x20] sm:$0xff]
        %v1471 = vld [vmem:[#allocation2 + $0x28] sm:$0xff]
        %v1472 = vld [vmem:[#allocation2 + $0x30] sm:$0xff]
        %v1473 = vld [vmem:[#allocation2 + $0x38] sm:$0xff]
        %v1474 = vadd.f32 %v1402, %v1410
        %v1475 = vadd.f32 %v1474, %v1418
        %v1476 = vadd.f32 %v1475, %v1426
        %v1477 = vadd.f32 %v1476, %v1434
        %v1478 = vadd.f32 %v1477, %v1442
        %v1479 = vadd.f32 %v1478, %v1450
        %v1480 = vadd.f32 %v1479, %v1458
        %v1481 = vadd.f32 %v1403, %v1411
        %v1482 = vadd.f32 %v1481, %v1419
        %v1483 = vadd.f32 %v1482, %v1427
        %v1484 = vadd.f32 %v1483, %v1435
        %v1485 = vadd.f32 %v1484, %v1443
        %v1486 = vadd.f32 %v1485, %v1451
        %v1487 = vadd.f32 %v1486, %v1459
        %v1488 = vadd.f32 %v1404, %v1412
        %v1489 = vadd.f32 %v1488, %v1420
        %v1490 = vadd.f32 %v1489, %v1428
        %v1491 = vadd.f32 %v1490, %v1436
        %v1492 = vadd.f32 %v1491, %v1444
        %v1493 = vadd.f32 %v1492, %v1452
        %v1494 = vadd.f32 %v1493, %v1460
        %v1495 = vadd.f32 %v1405, %v1413
        %v1496 = vadd.f32 %v1495, %v1421
        %v1497 = vadd.f32 %v1496, %v1429
        %v1498 = vadd.f32 %v1497, %v1437
        %v1499 = vadd.f32 %v1498, %v1445
        %v1500 = vadd.f32 %v1499, %v1453
        %v1501 = vadd.f32 %v1500, %v1461
        %v1502 = vadd.f32 %v1406, %v1414
        %v1503 = vadd.f32 %v1502, %v1422
        %v1504 = vadd.f32 %v1503, %v1430
        %v1505 = vadd.f32 %v1504, %v1438
        %v1506 = vadd.f32 %v1505, %v1446
        %v1507 = vadd.f32 %v1506, %v1454
        %v1508 = vadd.f32 %v1507, %v1462
        %v1509 = vadd.f32 %v1407, %v1415
        %v1510 = vadd.f32 %v1509, %v1423
        %v1511 = vadd.f32 %v1510, %v1431
        %v1512 = vadd.f32 %v1511, %v1439
        %v1513 = vadd.f32 %v1512, %v1447
        %v1514 = vadd.f32 %v1513, %v1455
        %v1515 = vadd.f32 %v1514, %v1463
        %v1516 = vadd.f32 %v1408, %v1416
        %v1517 = vadd.f32 %v1516, %v1424
        %v1518 = vadd.f32 %v1517, %v1432
        %v1519 = vadd.f32 %v1518, %v1440
        %v1520 = vadd.f32 %v1519, %v1448
        %v1521 = vadd.f32 %v1520, %v1456
        %v1522 = vadd.f32 %v1521, %v1464
        %v1523 = vadd.f32 %v1409, %v1417
        %v1524 = vadd.f32 %v1523, %v1425
        %v1525 = vadd.f32 %v1524, %v1433
        %v1526 = vadd.f32 %v1525, %v1441
        %v1527 = vadd.f32 %v1526, %v1449
        %v1528 = vadd.f32 %v1527, %v1457
        %v1529 = vadd.f32 %v1528, %v1465
        %v1530 = vadd.f32 %v1466, %v1480
        %v1531 = vadd.f32 %v1467, %v1487
        %v1532 = vadd.f32 %v1468, %v1494
        %v1533 = vadd.f32 %v1469, %v1501
        %v1534 = vadd.f32 %v1470, %v1508
        %v1535 = vadd.f32 %v1471, %v1515
        %v1536 = vadd.f32 %v1472, %v1522
        %v1537 = vadd.f32 %v1473, %v1529
        %v1538 = vld [vmem:[#allocation3] sm:$0xff]
        %v1539 = vld [vmem:[#allocation3 + $0x8] sm:$0xff]
        %v1540 = vld [vmem:[#allocation3 + $0x10] sm:$0xff]
        %v1541 = vld [vmem:[#allocation3 + $0x18] sm:$0xff]
        %v1542 = vld [vmem:[#allocation3 + $0x20] sm:$0xff]
        %v1543 = vld [vmem:[#allocation3 + $0x28] sm:$0xff]
        %v1544 = vld [vmem:[#allocation3 + $0x30] sm:$0xff]
        %v1545 = vld [vmem:[#allocation3 + $0x38] sm:$0xff]
        %v1546 = vmax.f32 %v1402, %v1410
        %v1547 = vmax.f32 %v1546, %v1418
        %v1548 = vmax.f32 %v1547, %v1426
        %v1549 = vmax.f32 %v1548, %v1434
        %v1550 = vmax.f32 %v1549, %v1442
        %v1551 = vmax.f32 %v1550, %v1450
        %v1552 = vmax.f32 %v1551, %v1458
        %v1553 = vmax.f32 %v1403, %v1411
        %v1554 = vmax.f32 %v1553, %v1419
        %v1555 = vmax.f32 %v1554, %v1427
        %v1556 = vmax.f32 %v1555, %v1435
        %v1557 = vmax.f32 %v1556, %v1443
        %v1558 = vmax.f32 %v1557, %v1451
        %v1559 = vmax.f32 %v1558, %v1459
        %v1560 = vmax.f32 %v1404, %v1412
        %v1561 = vmax.f32 %v1560, %v1420
        %v1562 = vmax.f32 %v1561, %v1428
        %v1563 = vmax.f32 %v1562, %v1436
        %v1564 = vmax.f32 %v1563, %v1444
        %v1565 = vmax.f32 %v1564, %v1452
        %v1566 = vmax.f32 %v1565, %v1460
        %v1567 = vmax.f32 %v1405, %v1413
        %v1568 = vmax.f32 %v1567, %v1421
        %v1569 = vmax.f32 %v1568, %v1429
        %v1570 = vmax.f32 %v1569, %v1437
        %v1571 = vmax.f32 %v1570, %v1445
        %v1572 = vmax.f32 %v1571, %v1453
        %v1573 = vmax.f32 %v1572, %v1461
        %v1574 = vmax.f32 %v1406, %v1414
        %v1575 = vmax.f32 %v1574, %v1422
        %v1576 = vmax.f32 %v1575, %v1430
        %v1577 = vmax.f32 %v1576, %v1438
        %v1578 = vmax.f32 %v1577, %v1446
        %v1579 = vmax.f32 %v1578, %v1454
        %v1580 = vmax.f32 %v1579, %v1462
        %v1581 = vmax.f32 %v1407, %v1415
        %v1582 = vmax.f32 %v1581, %v1423
        %v1583 = vmax.f32 %v1582, %v1431
        %v1584 = vmax.f32 %v1583, %v1439
        %v1585 = vmax.f32 %v1584, %v1447
        %v1586 = vmax.f32 %v1585, %v1455
        %v1587 = vmax.f32 %v1586, %v1463
        %v1588 = vmax.f32 %v1408, %v1416
        %v1589 = vmax.f32 %v1588, %v1424
        %v1590 = vmax.f32 %v1589, %v1432
        %v1591 = vmax.f32 %v1590, %v1440
        %v1592 = vmax.f32 %v1591, %v1448
        %v1593 = vmax.f32 %v1592, %v1456
        %v1594 = vmax.f32 %v1593, %v1464
        %v1595 = vmax.f32 %v1409, %v1417
        %v1596 = vmax.f32 %v1595, %v1425
        %v1597 = vmax.f32 %v1596, %v1433
        %v1598 = vmax.f32 %v1597, %v1441
        %v1599 = vmax.f32 %v1598, %v1449
        %v1600 = vmax.f32 %v1599, %v1457
        %v1601 = vmax.f32 %v1600, %v1465
        %v1602 = vmax.f32 %v1538, %v1552
        %v1603 = vmax.f32 %v1539, %v1559
        %v1604 = vmax.f32 %v1540, %v1566
        %v1605 = vmax.f32 %v1541, %v1573
        %v1606 = vmax.f32 %v1542, %v1580
        %v1607 = vmax.f32 %v1543, %v1587
        %v1608 = vmax.f32 %v1544, %v1594
        %v1609 = vmax.f32 %v1545, %v1601
        %v1610 = vrot.slane %v1530, 4
        %v1611 = vadd.f32 %v1530, %v1610
        %v1612 = vrot.slane %v1611, 2
        %v1613 = vadd.f32 %v1611, %v1612
        %v1614 = vrot.slane %v1613, 1
        %v1615 = vadd.f32 %v1613, %v1614
        %v1616 = vrot.slane %v1531, 4
        %v1617 = vadd.f32 %v1531, %v1616
        %v1618 = vrot.slane %v1617, 2
        %v1619 = vadd.f32 %v1617, %v1618
        %v1620 = vrot.slane %v1619, 1
        %v1621 = vadd.f32 %v1619, %v1620
        %v1622 = vrot.slane %v1532, 4
        %v1623 = vadd.f32 %v1532, %v1622
        %v1624 = vrot.slane %v1623, 2
        %v1625 = vadd.f32 %v1623, %v1624
        %v1626 = vrot.slane %v1625, 1
        %v1627 = vadd.f32 %v1625, %v1626
        %v1628 = vrot.slane %v1533, 4
        %v1629 = vadd.f32 %v1533, %v1628
        %v1630 = vrot.slane %v1629, 2
        %v1631 = vadd.f32 %v1629, %v1630
        %v1632 = vrot.slane %v1631, 1
        %v1633 = vadd.f32 %v1631, %v1632
        %v1634 = vrot.slane %v1534, 4
        %v1635 = vadd.f32 %v1534, %v1634
        %v1636 = vrot.slane %v1635, 2
        %v1637 = vadd.f32 %v1635, %v1636
        %v1638 = vrot.slane %v1637, 1
        %v1639 = vadd.f32 %v1637, %v1638
        %v1640 = vrot.slane %v1535, 4
        %v1641 = vadd.f32 %v1535, %v1640
        %v1642 = vrot.slane %v1641, 2
        %v1643 = vadd.f32 %v1641, %v1642
        %v1644 = vrot.slane %v1643, 1
        %v1645 = vadd.f32 %v1643, %v1644
        %v1646 = vrot.slane %v1536, 4
        %v1647 = vadd.f32 %v1536, %v1646
        %v1648 = vrot.slane %v1647, 2
        %v1649 = vadd.f32 %v1647, %v1648
        %v1650 = vrot.slane %v1649, 1
        %v1651 = vadd.f32 %v1649, %v1650
        %v1652 = vrot.slane %v1537, 4
        %v1653 = vadd.f32 %v1537, %v1652
        %v1654 = vrot.slane %v1653, 2
        %v1655 = vadd.f32 %v1653, %v1654
        %v1656 = vrot.slane %v1655, 1
        %v1657 = vadd.f32 %v1655, %v1656
        %v1658 = vrot.slane %v1602, 4
        %v1659 = vmax.f32 %v1602, %v1658
        %v1660 = vrot.slane %v1659, 2
        %v1661 = vmax.f32 %v1659, %v1660
        %v1662 = vrot.slane %v1661, 1
        %v1663 = vmax.f32 %v1661, %v1662
        %v1664 = vrot.slane %v1603, 4
        %v1665 = vmax.f32 %v1603, %v1664
        %v1666 = vrot.slane %v1665, 2
        %v1667 = vmax.f32 %v1665, %v1666
        %v1668 = vrot.slane %v1667, 1
        %v1669 = vmax.f32 %v1667, %v1668
        %v1670 = vrot.slane %v1604, 4
        %v1671 = vmax.f32 %v1604, %v1670
        %v1672 = vrot.slane %v1671, 2
        %v1673 = vmax.f32 %v1671, %v1672
        %v1674 = vrot.slane %v1673, 1
        %v1675 = vmax.f32 %v1673, %v1674
        %v1676 = vrot.slane %v1605, 4
        %v1677 = vmax.f32 %v1605, %v1676
        %v1678 = vrot.slane %v1677, 2
        %v1679 = vmax.f32 %v1677, %v1678
        %v1680 = vrot.slane %v1679, 1
        %v1681 = vmax.f32 %v1679, %v1680
        %v1682 = vrot.slane %v1606, 4
        %v1683 = vmax.f32 %v1606, %v1682
        %v1684 = vrot.slane %v1683, 2
        %v1685 = vmax.f32 %v1683, %v1684
        %v1686 = vrot.slane %v1685, 1
        %v1687 = vmax.f32 %v1685, %v1686
        %v1688 = vrot.slane %v1607, 4
        %v1689 = vmax.f32 %v1607, %v1688
        %v1690 = vrot.slane %v1689, 2
        %v1691 = vmax.f32 %v1689, %v1690
        %v1692 = vrot.slane %v1691, 1
        %v1693 = vmax.f32 %v1691, %v1692
        %v1694 = vrot.slane %v1608, 4
        %v1695 = vmax.f32 %v1608, %v1694
        %v1696 = vrot.slane %v1695, 2
        %v1697 = vmax.f32 %v1695, %v1696
        %v1698 = vrot.slane %v1697, 1
        %v1699 = vmax.f32 %v1697, %v1698
        %v1700 = vrot.slane %v1609, 4
        %v1701 = vmax.f32 %v1609, %v1700
        %v1702 = vrot.slane %v1701, 2
        %v1703 = vmax.f32 %v1701, %v1702
        %v1704 = vrot.slane %v1703, 1
        %v1705 = vmax.f32 %v1703, %v1704
        %v1706 = vmul.f32 %v1615, 0.015625
        %v1707 = vmul.f32 %v1621, 0.015625
        %v1708 = vmul.f32 %v1627, 0.015625
        %v1709 = vmul.f32 %v1633, 0.015625
        %v1710 = vmul.f32 %v1639, 0.015625
        %v1711 = vmul.f32 %v1645, 0.015625
        %v1712 = vmul.f32 %v1651, 0.015625
        %v1713 = vmul.f32 %v1657, 0.015625
        %v1714 = vadd.f32 %v1706, %v1663
        %v1715 = vadd.f32 %v1707, %v1669
        %v1716 = vadd.f32 %v1708, %v1675
        %v1717 = vadd.f32 %v1709, %v1681
        %v1718 = vadd.f32 %v1710, %v1687
        %v1719 = vadd.f32 %v1711, %v1693
        %v1720 = vadd.f32 %v1712, %v1699
        %v1721 = vadd.f32 %v1713, %v1705
        %v1722 = vpack.c.bf16 %v1714, %v1714
        %v1723 = vpack.c.bf16 %v1715, %v1715
        %v1724 = vpack.c.bf16 %v1716, %v1716
        %v1725 = vpack.c.bf16 %v1717, %v1717
        %v1726 = vpack.c.bf16 %v1718, %v1718
        %v1727 = vpack.c.bf16 %v1719, %v1719
        %v1728 = vpack.c.bf16 %v1720, %v1720
        %v1729 = vpack.c.bf16 %v1721, %v1721
        %v1730 = vld [vmem:[%s5] sm:$0xf]
        %v1731 = vld [vmem:[%s5 + $0x4] sm:$0xf]
        %v1732 = vld [vmem:[%s5 + $0x8] sm:$0xf]
        %v1733 = vld [vmem:[%s5 + $0xc] sm:$0xf]
        %v1734 = vld [vmem:[%s5 + $0x10] sm:$0xf]
        %v1735 = vld [vmem:[%s5 + $0x14] sm:$0xf]
        %v1736 = vld [vmem:[%s5 + $0x18] sm:$0xf]
        %v1737 = vld [vmem:[%s5 + $0x1c] sm:$0xf]
        %v1738 = vld [vmem:[%s5 + $0x20] sm:$0xf]
        %v1739 = vld [vmem:[%s5 + $0x24] sm:$0xf]
        %v1740 = vld [vmem:[%s5 + $0x28] sm:$0xf]
        %v1741 = vld [vmem:[%s5 + $0x2c] sm:$0xf]
        %v1742 = vld [vmem:[%s5 + $0x30] sm:$0xf]
        %v1743 = vld [vmem:[%s5 + $0x34] sm:$0xf]
        %v1744 = vld [vmem:[%s5 + $0x38] sm:$0xf]
        %v1745 = vld [vmem:[%s5 + $0x3c] sm:$0xf]
        %v1746 = vld [vmem:[%s5 + $0x40] sm:$0xf]
        %v1747 = vld [vmem:[%s5 + $0x44] sm:$0xf]
        %v1748 = vld [vmem:[%s5 + $0x48] sm:$0xf]
        %v1749 = vld [vmem:[%s5 + $0x4c] sm:$0xf]
        %v1750 = vld [vmem:[%s5 + $0x50] sm:$0xf]
        %v1751 = vld [vmem:[%s5 + $0x54] sm:$0xf]
        %v1752 = vld [vmem:[%s5 + $0x58] sm:$0xf]
        %v1753 = vld [vmem:[%s5 + $0x5c] sm:$0xf]
        %v1754 = vld [vmem:[%s5 + $0x60] sm:$0xf]
        %v1755 = vld [vmem:[%s5 + $0x64] sm:$0xf]
        %v1756 = vld [vmem:[%s5 + $0x68] sm:$0xf]
        %v1757 = vld [vmem:[%s5 + $0x6c] sm:$0xf]
        %v1758 = vld [vmem:[%s5 + $0x70] sm:$0xf]
        %v1759 = vld [vmem:[%s5 + $0x74] sm:$0xf]
        %v1760 = vld [vmem:[%s5 + $0x78] sm:$0xf]
        %v1761 = vld [vmem:[%s5 + $0x7c] sm:$0xf]
        %v1762 = vld [vmem:[%s5 + $0x80] sm:$0xf]
        %v1763 = vld [vmem:[%s5 + $0x84] sm:$0xf]
        %v1764 = vld [vmem:[%s5 + $0x88] sm:$0xf]
        %v1765 = vld [vmem:[%s5 + $0x8c] sm:$0xf]
        %v1766 = vld [vmem:[%s5 + $0x90] sm:$0xf]
        %v1767 = vld [vmem:[%s5 + $0x94] sm:$0xf]
        %v1768 = vld [vmem:[%s5 + $0x98] sm:$0xf]
        %v1769 = vld [vmem:[%s5 + $0x9c] sm:$0xf]
        %v1770 = vld [vmem:[%s5 + $0xa0] sm:$0xf]
        %v1771 = vld [vmem:[%s5 + $0xa4] sm:$0xf]
        %v1772 = vld [vmem:[%s5 + $0xa8] sm:$0xf]
        %v1773 = vld [vmem:[%s5 + $0xac] sm:$0xf]
        %v1774 = vld [vmem:[%s5 + $0xb0] sm:$0xf]
        %v1775 = vld [vmem:[%s5 + $0xb4] sm:$0xf]
        %v1776 = vld [vmem:[%s5 + $0xb8] sm:$0xf]
        %v1777 = vld [vmem:[%s5 + $0xbc] sm:$0xf]
        %v1778 = vld [vmem:[%s5 + $0xc0] sm:$0xf]
        %v1779 = vld [vmem:[%s5 + $0xc4] sm:$0xf]
        %v1780 = vld [vmem:[%s5 + $0xc8] sm:$0xf]
        %v1781 = vld [vmem:[%s5 + $0xcc] sm:$0xf]
        %v1782 = vld [vmem:[%s5 + $0xd0] sm:$0xf]
        %v1783 = vld [vmem:[%s5 + $0xd4] sm:$0xf]
        %v1784 = vld [vmem:[%s5 + $0xd8] sm:$0xf]
        %v1785 = vld [vmem:[%s5 + $0xdc] sm:$0xf]
        %v1786 = vld [vmem:[%s5 + $0xe0] sm:$0xf]
        %v1787 = vld [vmem:[%s5 + $0xe4] sm:$0xf]
        %v1788 = vld [vmem:[%s5 + $0xe8] sm:$0xf]
        %v1789 = vld [vmem:[%s5 + $0xec] sm:$0xf]
        %v1790 = vld [vmem:[%s5 + $0xf0] sm:$0xf]
        %v1791 = vld [vmem:[%s5 + $0xf4] sm:$0xf]
        %v1792 = vld [vmem:[%s5 + $0xf8] sm:$0xf]
        %v1793 = vld [vmem:[%s5 + $0xfc] sm:$0xf]
        %v1794 = vld [vmem:[%s5 + $0x100] sm:$0xf]
        %v1795 = vld [vmem:[%s5 + $0x104] sm:$0xf]
        %v1796 = vld [vmem:[%s5 + $0x108] sm:$0xf]
        %v1797 = vld [vmem:[%s5 + $0x10c] sm:$0xf]
        %v1798 = vld [vmem:[%s5 + $0x110] sm:$0xf]
        %v1799 = vld [vmem:[%s5 + $0x114] sm:$0xf]
        %v1800 = vld [vmem:[%s5 + $0x118] sm:$0xf]
        %v1801 = vld [vmem:[%s5 + $0x11c] sm:$0xf]
        %v1802 = vld [vmem:[%s5 + $0x120] sm:$0xf]
        %v1803 = vld [vmem:[%s5 + $0x124] sm:$0xf]
        %v1804 = vld [vmem:[%s5 + $0x128] sm:$0xf]
        %v1805 = vld [vmem:[%s5 + $0x12c] sm:$0xf]
        %v1806 = vld [vmem:[%s5 + $0x130] sm:$0xf]
        %v1807 = vld [vmem:[%s5 + $0x134] sm:$0xf]
        %v1808 = vld [vmem:[%s5 + $0x138] sm:$0xf]
        %v1809 = vld [vmem:[%s5 + $0x13c] sm:$0xf]
        %v1810 = vld [vmem:[%s5 + $0x140] sm:$0xf]
        %v1811 = vld [vmem:[%s5 + $0x144] sm:$0xf]
        %v1812 = vld [vmem:[%s5 + $0x148] sm:$0xf]
        %v1813 = vld [vmem:[%s5 + $0x14c] sm:$0xf]
        %v1814 = vld [vmem:[%s5 + $0x150] sm:$0xf]
        %v1815 = vld [vmem:[%s5 + $0x154] sm:$0xf]
        %v1816 = vld [vmem:[%s5 + $0x158] sm:$0xf]
        %v1817 = vld [vmem:[%s5 + $0x15c] sm:$0xf]
        %v1818 = vld [vmem:[%s5 + $0x160] sm:$0xf]
        %v1819 = vld [vmem:[%s5 + $0x164] sm:$0xf]
        %v1820 = vld [vmem:[%s5 + $0x168] sm:$0xf]
        %v1821 = vld [vmem:[%s5 + $0x16c] sm:$0xf]
        %v1822 = vld [vmem:[%s5 + $0x170] sm:$0xf]
        %v1823 = vld [vmem:[%s5 + $0x174] sm:$0xf]
        %v1824 = vld [vmem:[%s5 + $0x178] sm:$0xf]
        %v1825 = vld [vmem:[%s5 + $0x17c] sm:$0xf]
        %v1826 = vld [vmem:[%s5 + $0x180] sm:$0xf]
        %v1827 = vld [vmem:[%s5 + $0x184] sm:$0xf]
        %v1828 = vld [vmem:[%s5 + $0x188] sm:$0xf]
        %v1829 = vld [vmem:[%s5 + $0x18c] sm:$0xf]
        %v1830 = vld [vmem:[%s5 + $0x190] sm:$0xf]
        %v1831 = vld [vmem:[%s5 + $0x194] sm:$0xf]
        %v1832 = vld [vmem:[%s5 + $0x198] sm:$0xf]
        %v1833 = vld [vmem:[%s5 + $0x19c] sm:$0xf]
        %v1834 = vld [vmem:[%s5 + $0x1a0] sm:$0xf]
        %v1835 = vld [vmem:[%s5 + $0x1a4] sm:$0xf]
        %v1836 = vld [vmem:[%s5 + $0x1a8] sm:$0xf]
        %v1837 = vld [vmem:[%s5 + $0x1ac] sm:$0xf]
        %v1838 = vld [vmem:[%s5 + $0x1b0] sm:$0xf]
        %v1839 = vld [vmem:[%s5 + $0x1b4] sm:$0xf]
        %v1840 = vld [vmem:[%s5 + $0x1b8] sm:$0xf]
        %v1841 = vld [vmem:[%s5 + $0x1bc] sm:$0xf]
        %v1842 = vld [vmem:[%s5 + $0x1c0] sm:$0xf]
        %v1843 = vld [vmem:[%s5 + $0x1c4] sm:$0xf]
        %v1844 = vld [vmem:[%s5 + $0x1c8] sm:$0xf]
        %v1845 = vld [vmem:[%s5 + $0x1cc] sm:$0xf]
        %v1846 = vld [vmem:[%s5 + $0x1d0] sm:$0xf]
        %v1847 = vld [vmem:[%s5 + $0x1d4] sm:$0xf]
        %v1848 = vld [vmem:[%s5 + $0x1d8] sm:$0xf]
        %v1849 = vld [vmem:[%s5 + $0x1dc] sm:$0xf]
        %v1850 = vld [vmem:[%s5 + $0x1e0] sm:$0xf]
        %v1851 = vld [vmem:[%s5 + $0x1e4] sm:$0xf]
        %v1852 = vld [vmem:[%s5 + $0x1e8] sm:$0xf]
        %v1853 = vld [vmem:[%s5 + $0x1ec] sm:$0xf]
        %v1854 = vld [vmem:[%s5 + $0x1f0] sm:$0xf]
        %v1855 = vld [vmem:[%s5 + $0x1f4] sm:$0xf]
        %v1856 = vld [vmem:[%s5 + $0x1f8] sm:$0xf]
        %v1857 = vld [vmem:[%s5 + $0x1fc] sm:$0xf]
        %v1858 = vld [vmem:[%s6] sm:$0x1]
        %v1860 = vlaneseq
        %v1861 = vshrl.u32 %v1860, 7
        %v1862 = vsub.s32 0, %v1861
        %v1863 = vrot.slane %v1858, %v1862
        %v1993 = vunpack.c.l.b16 %v1730
        %v1994 = vunpack.c.l.b16 %v1731
        %v1995 = vunpack.c.l.b16 %v1732
        %v1996 = vunpack.c.l.b16 %v1733
        %v1997 = vunpack.c.l.b16 %v1734
        %v1998 = vunpack.c.l.b16 %v1735
        %v1999 = vunpack.c.l.b16 %v1736
        %v2000 = vunpack.c.l.b16 %v1737
        %v2001 = vunpack.c.l.b16 %v1738
        %v2002 = vunpack.c.l.b16 %v1739
        %v2003 = vunpack.c.l.b16 %v1740
        %v2004 = vunpack.c.l.b16 %v1741
        %v2005 = vunpack.c.l.b16 %v1742
        %v2006 = vunpack.c.l.b16 %v1743
        %v2007 = vunpack.c.l.b16 %v1744
        %v2008 = vunpack.c.l.b16 %v1745
        %v2009 = vunpack.c.l.b16 %v1746
        %v2010 = vunpack.c.l.b16 %v1747
        %v2011 = vunpack.c.l.b16 %v1748
        %v2012 = vunpack.c.l.b16 %v1749
        %v2013 = vunpack.c.l.b16 %v1750
        %v2014 = vunpack.c.l.b16 %v1751
        %v2015 = vunpack.c.l.b16 %v1752
        %v2016 = vunpack.c.l.b16 %v1753
        %v2017 = vunpack.c.l.b16 %v1754
        %v2018 = vunpack.c.l.b16 %v1755
        %v2019 = vunpack.c.l.b16 %v1756
        %v2020 = vunpack.c.l.b16 %v1757
        %v2021 = vunpack.c.l.b16 %v1758
        %v2022 = vunpack.c.l.b16 %v1759
        %v2023 = vunpack.c.l.b16 %v1760
        %v2024 = vunpack.c.l.b16 %v1761
        %v2025 = vunpack.c.l.b16 %v1762
        %v2026 = vunpack.c.l.b16 %v1763
        %v2027 = vunpack.c.l.b16 %v1764
        %v2028 = vunpack.c.l.b16 %v1765
        %v2029 = vunpack.c.l.b16 %v1766
        %v2030 = vunpack.c.l.b16 %v1767
        %v2031 = vunpack.c.l.b16 %v1768
        %v2032 = vunpack.c.l.b16 %v1769
        %v2033 = vunpack.c.l.b16 %v1770
        %v2034 = vunpack.c.l.b16 %v1771
        %v2035 = vunpack.c.l.b16 %v1772
        %v2036 = vunpack.c.l.b16 %v1773
        %v2037 = vunpack.c.l.b16 %v1774
        %v2038 = vunpack.c.l.b16 %v1775
        %v2039 = vunpack.c.l.b16 %v1776
        %v2040 = vunpack.c.l.b16 %v1777
        %v2041 = vunpack.c.l.b16 %v1778
        %v2042 = vunpack.c.l.b16 %v1779
        %v2043 = vunpack.c.l.b16 %v1780
        %v2044 = vunpack.c.l.b16 %v1781
        %v2045 = vunpack.c.l.b16 %v1782
        %v2046 = vunpack.c.l.b16 %v1783
        %v2047 = vunpack.c.l.b16 %v1784
        %v2048 = vunpack.c.l.b16 %v1785
        %v2049 = vunpack.c.l.b16 %v1786
        %v2050 = vunpack.c.l.b16 %v1787
        %v2051 = vunpack.c.l.b16 %v1788
        %v2052 = vunpack.c.l.b16 %v1789
        %v2053 = vunpack.c.l.b16 %v1790
        %v2054 = vunpack.c.l.b16 %v1791
        %v2055 = vunpack.c.l.b16 %v1792
        %v2056 = vunpack.c.l.b16 %v1793
        %v2057 = vunpack.c.l.b16 %v1794
        %v2058 = vunpack.c.l.b16 %v1795
        %v2059 = vunpack.c.l.b16 %v1796
        %v2060 = vunpack.c.l.b16 %v1797
        %v2061 = vunpack.c.l.b16 %v1798
        %v2062 = vunpack.c.l.b16 %v1799
        %v2063 = vunpack.c.l.b16 %v1800
        %v2064 = vunpack.c.l.b16 %v1801
        %v2065 = vunpack.c.l.b16 %v1802
        %v2066 = vunpack.c.l.b16 %v1803
        %v2067 = vunpack.c.l.b16 %v1804
        %v2068 = vunpack.c.l.b16 %v1805
        %v2069 = vunpack.c.l.b16 %v1806
        %v2070 = vunpack.c.l.b16 %v1807
        %v2071 = vunpack.c.l.b16 %v1808
        %v2072 = vunpack.c.l.b16 %v1809
        %v2073 = vunpack.c.l.b16 %v1810
        %v2074 = vunpack.c.l.b16 %v1811
        %v2075 = vunpack.c.l.b16 %v1812
        %v2076 = vunpack.c.l.b16 %v1813
        %v2077 = vunpack.c.l.b16 %v1814
        %v2078 = vunpack.c.l.b16 %v1815
        %v2079 = vunpack.c.l.b16 %v1816
        %v2080 = vunpack.c.l.b16 %v1817
        %v2081 = vunpack.c.l.b16 %v1818
        %v2082 = vunpack.c.l.b16 %v1819
        %v2083 = vunpack.c.l.b16 %v1820
        %v2084 = vunpack.c.l.b16 %v1821
        %v2085 = vunpack.c.l.b16 %v1822
        %v2086 = vunpack.c.l.b16 %v1823
        %v2087 = vunpack.c.l.b16 %v1824
        %v2088 = vunpack.c.l.b16 %v1825
        %v2089 = vunpack.c.l.b16 %v1826
        %v2090 = vunpack.c.l.b16 %v1827
        %v2091 = vunpack.c.l.b16 %v1828
        %v2092 = vunpack.c.l.b16 %v1829
        %v2093 = vunpack.c.l.b16 %v1830
        %v2094 = vunpack.c.l.b16 %v1831
        %v2095 = vunpack.c.l.b16 %v1832
        %v2096 = vunpack.c.l.b16 %v1833
        %v2097 = vunpack.c.l.b16 %v1834
        %v2098 = vunpack.c.l.b16 %v1835
        %v2099 = vunpack.c.l.b16 %v1836
        %v2100 = vunpack.c.l.b16 %v1837
        %v2101 = vunpack.c.l.b16 %v1838
        %v2102 = vunpack.c.l.b16 %v1839
        %v2103 = vunpack.c.l.b16 %v1840
        %v2104 = vunpack.c.l.b16 %v1841
        %v2105 = vunpack.c.l.b16 %v1842
        %v2106 = vunpack.c.l.b16 %v1843
        %v2107 = vunpack.c.l.b16 %v1844
        %v2108 = vunpack.c.l.b16 %v1845
        %v2109 = vunpack.c.l.b16 %v1846
        %v2110 = vunpack.c.l.b16 %v1847
        %v2111 = vunpack.c.l.b16 %v1848
        %v2112 = vunpack.c.l.b16 %v1849
        %v2113 = vunpack.c.l.b16 %v1850
        %v2114 = vunpack.c.l.b16 %v1851
        %v2115 = vunpack.c.l.b16 %v1852
        %v2116 = vunpack.c.l.b16 %v1853
        %v2117 = vunpack.c.l.b16 %v1854
        %v2118 = vunpack.c.l.b16 %v1855
        %v2119 = vunpack.c.l.b16 %v1856
        %v2120 = vunpack.c.l.b16 %v1857
        %v2121 = vpack.c.b16 %v1994, %v1993
        %v2122 = vpack.c.b16 %v1996, %v1995
        %v2123 = vpack.c.b16 %v1998, %v1997
        %v2124 = vpack.c.b16 %v2000, %v1999
        %v2125 = vpack.c.b16 %v2002, %v2001
        %v2126 = vpack.c.b16 %v2004, %v2003
        %v2127 = vpack.c.b16 %v2006, %v2005
        %v2128 = vpack.c.b16 %v2008, %v2007
        %v2129 = vpack.c.b16 %v2010, %v2009
        %v2130 = vpack.c.b16 %v2012, %v2011
        %v2131 = vpack.c.b16 %v2014, %v2013
        %v2132 = vpack.c.b16 %v2016, %v2015
        %v2133 = vpack.c.b16 %v2018, %v2017
        %v2134 = vpack.c.b16 %v2020, %v2019
        %v2135 = vpack.c.b16 %v2022, %v2021
        %v2136 = vpack.c.b16 %v2024, %v2023
        %v2137 = vpack.c.b16 %v2026, %v2025
        %v2138 = vpack.c.b16 %v2028, %v2027
        %v2139 = vpack.c.b16 %v2030, %v2029
        %v2140 = vpack.c.b16 %v2032, %v2031
        %v2141 = vpack.c.b16 %v2034, %v2033
        %v2142 = vpack.c.b16 %v2036, %v2035
        %v2143 = vpack.c.b16 %v2038, %v2037
        %v2144 = vpack.c.b16 %v2040, %v2039
        %v2145 = vpack.c.b16 %v2042, %v2041
        %v2146 = vpack.c.b16 %v2044, %v2043
        %v2147 = vpack.c.b16 %v2046, %v2045
        %v2148 = vpack.c.b16 %v2048, %v2047
        %v2149 = vpack.c.b16 %v2050, %v2049
        %v2150 = vpack.c.b16 %v2052, %v2051
        %v2151 = vpack.c.b16 %v2054, %v2053
        %v2152 = vpack.c.b16 %v2056, %v2055
        %v2153 = vpack.c.b16 %v2058, %v2057
        %v2154 = vpack.c.b16 %v2060, %v2059
        %v2155 = vpack.c.b16 %v2062, %v2061
        %v2156 = vpack.c.b16 %v2064, %v2063
        %v2157 = vpack.c.b16 %v2066, %v2065
        %v2158 = vpack.c.b16 %v2068, %v2067
        %v2159 = vpack.c.b16 %v2070, %v2069
        %v2160 = vpack.c.b16 %v2072, %v2071
        %v2161 = vpack.c.b16 %v2074, %v2073
        %v2162 = vpack.c.b16 %v2076, %v2075
        %v2163 = vpack.c.b16 %v2078, %v2077
        %v2164 = vpack.c.b16 %v2080, %v2079
        %v2165 = vpack.c.b16 %v2082, %v2081
        %v2166 = vpack.c.b16 %v2084, %v2083
        %v2167 = vpack.c.b16 %v2086, %v2085
        %v2168 = vpack.c.b16 %v2088, %v2087
        %v2169 = vpack.c.b16 %v2090, %v2089
        %v2170 = vpack.c.b16 %v2092, %v2091
        %v2171 = vpack.c.b16 %v2094, %v2093
        %v2172 = vpack.c.b16 %v2096, %v2095
        %v2173 = vpack.c.b16 %v2098, %v2097
        %v2174 = vpack.c.b16 %v2100, %v2099
        %v2175 = vpack.c.b16 %v2102, %v2101
        %v2176 = vpack.c.b16 %v2104, %v2103
        %v2177 = vpack.c.b16 %v2106, %v2105
        %v2178 = vpack.c.b16 %v2108, %v2107
        %v2179 = vpack.c.b16 %v2110, %v2109
        %v2180 = vpack.c.b16 %v2112, %v2111
        %v2181 = vpack.c.b16 %v2114, %v2113
        %v2182 = vpack.c.b16 %v2116, %v2115
        %v2183 = vpack.c.b16 %v2118, %v2117
        %v2184 = vpack.c.b16 %v2120, %v2119
        %2249 = vmatprep.subr.bf16.mxu0 0
        %2250 = vmatpush1.bf16.msra.mxu0 %v2128
        %2251 = vmatprep.subr.bf16.mxu0 0
        %2252 = vmatpush1.bf16.msra.mxu0 %v2127
        %2253 = vmatprep.subr.bf16.mxu0 0
        %2254 = vmatpush1.bf16.msra.mxu0 %v2126
        %2255 = vmatprep.subr.bf16.mxu0 0
        %2256 = vmatpush1.bf16.msra.mxu0 %v2125
        %2257 = vmatprep.subr.bf16.mxu0 0
        %2258 = vmatpush1.bf16.msra.mxu0 %v2124
        %2259 = vmatprep.subr.bf16.mxu0 0
        %2260 = vmatpush1.bf16.msra.mxu0 %v2123
        %2261 = vmatprep.subr.bf16.mxu0 0
        %2262 = vmatpush1.bf16.msra.mxu0 %v2122
        %2263 = vmatprep.subr.bf16.mxu0 0
        %2264 = vmatpush1.bf16.msra.mxu0 %v2121
        %2265 = vmatprep.subr.bf16.mxu0 0
        %2266 = vmatpush2.bf16.msra.mxu0 %v2136
        %2267 = vmatprep.subr.bf16.mxu0 0
        %2268 = vmatpush2.bf16.msra.mxu0 %v2135
        %2269 = vmatprep.subr.bf16.mxu0 0
        %2270 = vmatpush2.bf16.msra.mxu0 %v2134
        %2271 = vmatprep.subr.bf16.mxu0 0
        %2272 = vmatpush2.bf16.msra.mxu0 %v2133
        %2273 = vmatprep.subr.bf16.mxu0 0
        %2274 = vmatpush2.bf16.msra.mxu0 %v2132
        %2275 = vmatprep.subr.bf16.mxu0 0
        %2276 = vmatpush2.bf16.msra.mxu0 %v2131
        %2277 = vmatprep.subr.bf16.mxu0 0
        %2278 = vmatpush2.bf16.msra.mxu0 %v2130
        %2279 = vmatprep.subr.bf16.mxu0 0
        %2280 = vmatpush2.bf16.msra.mxu0 %v2129
        %2281 = vmatprep.mubr.bf16.mxu0 %v1723
        %2282 = vmatmul.mubr.bf16.gmra.mxu0 %v1722
        %v2283 = vpop.f32.mrf.mxu0
        %v2284 = vadd.f32 %v1863, %v2283
        %v2285 = vpop.f32.mrf.mxu0
        %v2286 = vpop.f32.mrf.mxu0
        %v2287 = vpop.f32.mrf.mxu0
        %2288 = vdwg.mxu0
        %2289 = vmatprep.subr.bf16.mxu0 0
        %2290 = vmatpush1.bf16.msra.mxu0 %v2144
        %2291 = vmatprep.subr.bf16.mxu0 0
        %2292 = vmatpush1.bf16.msra.mxu0 %v2143
        %2293 = vmatprep.subr.bf16.mxu0 0
        %2294 = vmatpush1.bf16.msra.mxu0 %v2142
        %2295 = vmatprep.subr.bf16.mxu0 0
        %2296 = vmatpush1.bf16.msra.mxu0 %v2141
        %2297 = vmatprep.subr.bf16.mxu0 0
        %2298 = vmatpush1.bf16.msra.mxu0 %v2140
        %2299 = vmatprep.subr.bf16.mxu0 0
        %2300 = vmatpush1.bf16.msra.mxu0 %v2139
        %2301 = vmatprep.subr.bf16.mxu0 0
        %2302 = vmatpush1.bf16.msra.mxu0 %v2138
        %2303 = vmatprep.subr.bf16.mxu0 0
        %2304 = vmatpush1.bf16.msra.mxu0 %v2137
        %2305 = vmatprep.subr.bf16.mxu0 0
        %2306 = vmatpush2.bf16.msra.mxu0 %v2152
        %2307 = vmatprep.subr.bf16.mxu0 0
        %2308 = vmatpush2.bf16.msra.mxu0 %v2151
        %2309 = vmatprep.subr.bf16.mxu0 0
        %2310 = vmatpush2.bf16.msra.mxu0 %v2150
        %2311 = vmatprep.subr.bf16.mxu0 0
        %2312 = vmatpush2.bf16.msra.mxu0 %v2149
        %2313 = vmatprep.subr.bf16.mxu0 0
        %2314 = vmatpush2.bf16.msra.mxu0 %v2148
        %2315 = vmatprep.subr.bf16.mxu0 0
        %2316 = vmatpush2.bf16.msra.mxu0 %v2147
        %2317 = vmatprep.subr.bf16.mxu0 0
        %2318 = vmatpush2.bf16.msra.mxu0 %v2146
        %2319 = vmatprep.subr.bf16.mxu0 0
        %2320 = vmatpush2.bf16.msra.mxu0 %v2145
        %2321 = vmatprep.mubr.bf16.mxu0 %v1725
        %2322 = vmatmul.mubr.bf16.gmra.mxu0 %v1724
        %v2323 = vpop.f32.mrf.mxu0
        %v2324 = vadd.f32 %v2284, %v2323
        %v2325 = vpop.f32.mrf.mxu0
        %v2326 = vpop.f32.mrf.mxu0
        %v2327 = vpop.f32.mrf.mxu0
        %2328 = vdwg.mxu0
        %2329 = vmatprep.subr.bf16.mxu0 0
        %2330 = vmatpush1.bf16.msra.mxu0 %v2160
        %2331 = vmatprep.subr.bf16.mxu0 0
        %2332 = vmatpush1.bf16.msra.mxu0 %v2159
        %2333 = vmatprep.subr.bf16.mxu0 0
        %2334 = vmatpush1.bf16.msra.mxu0 %v2158
        %2335 = vmatprep.subr.bf16.mxu0 0
        %2336 = vmatpush1.bf16.msra.mxu0 %v2157
        %2337 = vmatprep.subr.bf16.mxu0 0
        %2338 = vmatpush1.bf16.msra.mxu0 %v2156
        %2339 = vmatprep.subr.bf16.mxu0 0
        %2340 = vmatpush1.bf16.msra.mxu0 %v2155
        %2341 = vmatprep.subr.bf16.mxu0 0
        %2342 = vmatpush1.bf16.msra.mxu0 %v2154
        %2343 = vmatprep.subr.bf16.mxu0 0
        %2344 = vmatpush1.bf16.msra.mxu0 %v2153
        %2345 = vmatprep.subr.bf16.mxu0 0
        %2346 = vmatpush2.bf16.msra.mxu0 %v2168
        %2347 = vmatprep.subr.bf16.mxu0 0
        %2348 = vmatpush2.bf16.msra.mxu0 %v2167
        %2349 = vmatprep.subr.bf16.mxu0 0
        %2350 = vmatpush2.bf16.msra.mxu0 %v2166
        %2351 = vmatprep.subr.bf16.mxu0 0
        %2352 = vmatpush2.bf16.msra.mxu0 %v2165
        %2353 = vmatprep.subr.bf16.mxu0 0
        %2354 = vmatpush2.bf16.msra.mxu0 %v2164
        %2355 = vmatprep.subr.bf16.mxu0 0
        %2356 = vmatpush2.bf16.msra.mxu0 %v2163
        %2357 = vmatprep.subr.bf16.mxu0 0
        %2358 = vmatpush2.bf16.msra.mxu0 %v2162
        %2359 = vmatprep.subr.bf16.mxu0 0
        %2360 = vmatpush2.bf16.msra.mxu0 %v2161
        %2361 = vmatprep.mubr.bf16.mxu0 %v1727
        %2362 = vmatmul.mubr.bf16.gmra.mxu0 %v1726
        %v2363 = vpop.f32.mrf.mxu0
        %v2364 = vadd.f32 %v2324, %v2363
        %v2365 = vpop.f32.mrf.mxu0
        %v2366 = vpop.f32.mrf.mxu0
        %v2367 = vpop.f32.mrf.mxu0
        %2368 = vdwg.mxu0
        %2369 = vmatprep.subr.bf16.mxu0 0
        %2370 = vmatpush1.bf16.msra.mxu0 %v2176
        %2371 = vmatprep.subr.bf16.mxu0 0
        %2372 = vmatpush1.bf16.msra.mxu0 %v2175
        %2373 = vmatprep.subr.bf16.mxu0 0
        %2374 = vmatpush1.bf16.msra.mxu0 %v2174
        %2375 = vmatprep.subr.bf16.mxu0 0
        %2376 = vmatpush1.bf16.msra.mxu0 %v2173
        %2377 = vmatprep.subr.bf16.mxu0 0
        %2378 = vmatpush1.bf16.msra.mxu0 %v2172
        %2379 = vmatprep.subr.bf16.mxu0 0
        %2380 = vmatpush1.bf16.msra.mxu0 %v2171
        %2381 = vmatprep.subr.bf16.mxu0 0
        %2382 = vmatpush1.bf16.msra.mxu0 %v2170
        %2383 = vmatprep.subr.bf16.mxu0 0
        %2384 = vmatpush1.bf16.msra.mxu0 %v2169
        %2385 = vmatprep.subr.bf16.mxu0 0
        %2386 = vmatpush2.bf16.msra.mxu0 %v2184
        %2387 = vmatprep.subr.bf16.mxu0 0
        %2388 = vmatpush2.bf16.msra.mxu0 %v2183
        %2389 = vmatprep.subr.bf16.mxu0 0
        %2390 = vmatpush2.bf16.msra.mxu0 %v2182
        %2391 = vmatprep.subr.bf16.mxu0 0
        %2392 = vmatpush2.bf16.msra.mxu0 %v2181
        %2393 = vmatprep.subr.bf16.mxu0 0
        %2394 = vmatpush2.bf16.msra.mxu0 %v2180
        %2395 = vmatprep.subr.bf16.mxu0 0
        %2396 = vmatpush2.bf16.msra.mxu0 %v2179
        %2397 = vmatprep.subr.bf16.mxu0 0
        %2398 = vmatpush2.bf16.msra.mxu0 %v2178
        %2399 = vmatprep.subr.bf16.mxu0 0
        %2400 = vmatpush2.bf16.msra.mxu0 %v2177
        %2401 = vmatprep.mubr.bf16.mxu0 %v1729
        %2402 = vmatmul.mubr.bf16.gmra.mxu0 %v1728
        %v2403 = vpop.f32.mrf.mxu0
        %v2404 = vadd.f32 %v2364, %v2403
        %v2405 = vpop.f32.mrf.mxu0
        %v2406 = vpop.f32.mrf.mxu0
        %v2407 = vpop.f32.mrf.mxu0
        %2408 = vdwg.mxu0
        %2409 = vst [vmem:[%s307] sm:$0xff] %v2404
      $region60: #{model_forward.1} parent=47 // pred_fallthru
        _
      %p2410 = scmp.lt.s32.totalorder %s22, 1
      %s2411 = scalar_select %p2410, %s22, 1
      %s2412 = smul.addr %s2411, 8
      %s2413 = scalar_lea.vmem %s7, %s2412
      // Predicated region
      $region61: #{model_forward.1} parent=47 // pred_check
        %p2414 = pneg %p202
      $region62: #{model_forward.1} parent=47 // pred_check_branch
        %2416 = sbr.rel (%p2414) target = $region64
      $region63: #{model_forward.1} parent=47 // pred_region
        _
      $region64: #{model_forward.1} parent=47 // pred_fallthru
        _
    $region48: #{model_forward.1} parent=5 // pred_fallthru
      _
    %p2417 = scmp.le.s32.totalorder 2, %s13
    // Predicated region
    $region65: #{model_forward.1} parent=5 // pred_check
      %p2418 = pneg %p2417
    $region66: #{model_forward.1} parent=5 // pred_check_branch
      %2420 = sbr.rel (%p2418) target = $region68
    $region67: #{model_forward.1} parent=5 // pred_region
      %s2421 = ssub.s32 %s13, 2
      // Predicated region
      $region69: #{model_forward.1} parent=67 // pred_check
        %p2422 = pneg %p208
      $region70: #{model_forward.1} parent=67 // pred_check_branch
        %2424 = sbr.rel (%p2422) target = $region72
      $region71: #{model_forward.1} parent=67 // pred_region
        %p2425 = scmp.lt.s32.totalorder %s24, 1
        %s2426 = scalar_select %p2425, %s24, 1
        %s2427 = smul.addr %s2426, 8
        %s2428 = scalar_lea.vmem %s7, %s2427
      $region72: #{model_forward.1} parent=67 // pred_fallthru
        _
    $region68: #{model_forward.1} parent=5 // pred_fallthru
      _
  $region6: #{model_forward.1} parent=0 // loop_footer
    %s17 = sadd.s32 1, %s13
  $region7: #{model_forward.1} parent=0 // loop_footer_branch
    %12 = sbr.rel target = $region3
  $region8: #{model_forward.1} parent=0 // loop_exit
    _

</llo_original>
